<compile_context>
chip_gen: v7x
topology: tpu7x:2x2x1
jax: 0.10.0
libtpu: 0.0.40
codegen_flags: <defaults>
</compile_context>

<pallas_src>
import jax
import jax.numpy as jnp
from jax.experimental import pallas as pl
from jax.experimental.pallas import tpu as pltpu

_SINGLE_BUFFER_WEIGHTS = True  # halve weight VMEM; auto-fallback if unsupported


def _round_up(a, m):
    return -(-a // m) * m


def _split_mlp_kernel(t2c_ref, x_ref, w1_ref, b1_ref, w2_ref, b2_ref, o_ref):
    # t2c_ref: (num_tiles,) SMEM  tile -> chunk map (consumed by index_maps)
    # x_ref  : (TM, d)            row tile; all rows belong to one chunk
    # w1_ref : (1, d, Hp)         compute dtype (bf16 by default)
    # b1_ref : (1, 1, Hp)         f32
    # w2_ref : (1, Hp, dp)        compute dtype
    # b2_ref : (1, 1, dp)         f32
    # o_ref  : (TM, dp)           lane-dense output tile
    del t2c_ref
    x = x_ref[...].astype(w1_ref.dtype)                               # (TM, d)
    h = jnp.dot(x, w1_ref[0], preferred_element_type=jnp.float32)     # (TM, Hp)
    h = h + b1_ref[0]
    h = h * jax.nn.sigmoid(h)                                         # SiLU (EUP)
    y = jnp.dot(h.astype(w2_ref.dtype), w2_ref[0],
                preferred_element_type=jnp.float32)                   # (TM, dp)
    y = y + b2_ref[0]
    o_ref[...] = y.astype(o_ref.dtype)


def _split_mlps_call(t2c, xr, w1p, b1p, w2p, b2p, *, tm, d, dp, Hp,
                     out_dtype, vmem_limit, single_buffer_weights):
    rows = xr.shape[0]
    num_tiles = rows // tm

    if single_buffer_weights:
        # Weights/biases only change at chunk boundaries; the exposed DMA at a
        # chunk transition is paid num_chunks times per call (negligible).
        def wspec(shape, imap):
            return pl.BlockSpec(shape, imap, pipeline_mode=pl.Buffered(1))
    else:
        def wspec(shape, imap):
            return pl.BlockSpec(shape, imap)

    grid_spec = pltpu.PrefetchScalarGridSpec(
        num_scalar_prefetch=1,               # tile->chunk map lands in SMEM
        grid=(num_tiles,),                   # 1-D grid over row tiles
        in_specs=[
            pl.BlockSpec((tm, d), lambda t, s: (t, 0)),         # x row tile
            wspec((1, d, Hp), lambda t, s: (s[t], 0, 0)),       # W1
            wspec((1, 1, Hp), lambda t, s: (s[t], 0, 0)),       # b1
            wspec((1, Hp, dp), lambda t, s: (s[t], 0, 0)),      # W2
            wspec((1, 1, dp), lambda t, s: (s[t], 0, 0)),       # b2
        ],
        out_specs=pl.BlockSpec((tm, dp), lambda t, s: (t, 0)),
    )
    return pl.pallas_call(
        _split_mlp_kernel,
        out_shape=jax.ShapeDtypeStruct((rows, dp), out_dtype),
        grid_spec=grid_spec,
        compiler_params=pltpu.CompilerParams(
            dimension_semantics=("parallel",),   # fully independent tiles
            vmem_limit_bytes=vmem_limit,
        ),
    )(t2c, xr, w1p, b1p, w2p, b2p)


def split_mlps(x, chunk_sizes, w1, b1, w2, b2, *, tm=None,
               compute_dtype=jnp.bfloat16):
    """x: (..., N, d) with N == sum(chunk_sizes). Returns (..., N, d).

    w1: (C, d, H), b1: (C, H), w2: (C, H, d), b2: (C, d).
    """
    *lead, N, d = x.shape
    assert N == sum(chunk_sizes)
    num_chunks, d_w, H = w1.shape
    assert d_w == d and len(chunk_sizes) == num_chunks

    B = 1
    for s in lead:
        B *= int(s)
    xb = x.reshape(B, N, d)

    dp = _round_up(d, 128)      # lane-dense output feature width
    Hp = _round_up(H, 128)      # lane-dense hidden width

    # Zero-pad only the hidden dim and the OUTPUT feature dim of the weights
    # (padded rows/cols contribute exactly 0); W1 keeps its d-row contraction
    # dim so x never needs a feature-padding copy in HBM.  Cast matmul
    # weights to the compute dtype; biases stay f32 (added to the f32 acc).
    w1p = jnp.pad(w1, ((0, 0), (0, 0), (0, Hp - H))).astype(compute_dtype)
    w2p = jnp.pad(w2, ((0, 0), (0, Hp - H), (0, dp - d))).astype(compute_dtype)
    b1p = jnp.pad(b1, ((0, 0), (0, Hp - H))).astype(jnp.float32)
    b1p = b1p.reshape(num_chunks, 1, Hp)
    b2p = jnp.pad(b2, ((0, 0), (0, dp - d))).astype(jnp.float32)
    b2p = b2p.reshape(num_chunks, 1, dp)

    # Row-tile size: prefer 256 (fills the 256-deep MXU on v6e/v7x); use 128
    # only if that turns every chunk tile-aligned (zero-copy fast path).
    if tm is None:
        tm = 256
        for cand in (256, 128):
            if all(cs % cand == 0 for cs in chunk_sizes):
                tm = cand
                break
    aligned = all(cs % tm == 0 for cs in chunk_sizes)

    if aligned:
        # Zero-copy: batch-major 2-D row view.  Every chunk boundary (within
        # each batch element's N-row range) falls on a tile boundary.
        xr = xb.reshape(B * N, d)
        t2c_one = []
        for ci, cs in enumerate(chunk_sizes):
            t2c_one += [ci] * (cs // tm)
        tile2chunk = t2c_one * B
    else:
        # Ragged chunks: fold batch into rows chunk-major so row padding is
        # (-B*cs) % tm per chunk (not per (batch, chunk)) and each chunk's
        # weights are fetched once total.
        pieces, tile2chunk, off = [], [], 0
        for ci, cs in enumerate(chunk_sizes):
            rows = xb[:, off:off + cs, :].reshape(B * cs, d)
            rpad = (-(B * cs)) % tm
            if rpad:
                rows = jnp.pad(rows, ((0, rpad), (0, 0)))
            pieces.append(rows)
            tile2chunk += [ci] * ((B * cs + rpad) // tm)
            off += cs
        xr = jnp.concatenate(pieces, axis=0)

    t2c = jnp.asarray(tile2chunk, dtype=jnp.int32)

    # VMEM budget: explicit per-buffer accounting + scratch headroom, capped
    # below physical VMEM per generation (96 MiB on v5e/v6e, 48 MiB on v7x).
    def _vmem_limit(weight_bufs):
        cb = jnp.dtype(compute_dtype).itemsize
        ab = jnp.dtype(x.dtype).itemsize
        need = (2 * tm * _round_up(d, 128) * ab             # x, double-buffered
                + 2 * tm * dp * ab                          # out, double-buffered
                + weight_bufs * (_round_up(d, 8) * Hp + Hp * dp) * cb  # W1+W2
                + weight_bufs * 8 * (Hp + dp) * 4            # biases (f32)
                + (4 << 20))                                 # compiler scratch
        try:
            phys = pltpu.get_tpu_info().vmem_capacity_bytes
        except Exception:
            phys = 64 << 20                                  # conservative (v7x)
        return int(min(max(need, 32 << 20), phys * 3 // 4))
    # TODO(synk): for configs where bf16 W1+W2 exceed ~half of VMEM on v7x
    # (e.g. d=1024, H=4096), add a hidden-dim reduction grid axis.

    common = dict(tm=tm, d=d, dp=dp, Hp=Hp, out_dtype=x.dtype)
    out = None
    if _SINGLE_BUFFER_WEIGHTS:
        try:
            out = _split_mlps_call(t2c, xr, w1p, b1p, w2p, b2p,
                                   vmem_limit=_vmem_limit(1),
                                   single_buffer_weights=True, **common)
        except Exception:
            out = None   # pipeline_mode=pl.Buffered(1) unsupported -> fallback
    if out is None:
        out = _split_mlps_call(t2c, xr, w1p, b1p, w2p, b2p,
                               vmem_limit=_vmem_limit(2),
                               single_buffer_weights=False, **common)

    # Un-fold rows, strip row padding and (possibly) output feature padding.
    if aligned:
        out3 = out.reshape(B, N, dp)
    else:
        chunks_out, poff = [], 0
        for cs in chunk_sizes:
            rpad = (-(B * cs)) % tm
            chunks_out.append(out[poff:poff + B * cs].reshape(B, cs, dp))
            poff += B * cs + rpad
        out3 = jnp.concatenate(chunks_out, axis=1)
    if dp != d:
        out3 = out3[..., :d]
    return out3.reshape(*lead, N, d)


def _reference(x, chunk_sizes, w1, b1, w2, b2, compute_dtype=jnp.float32):
    """Pure-JAX reference matching the PyTorch forward; optionally emulates
    the kernel's bf16-operand / f32-accumulate matmuls for apples-to-apples."""
    outs, off = [], 0
    for ci, cs in enumerate(chunk_sizes):
        chunk = x[..., off:off + cs, :].astype(compute_dtype)
        h = jnp.einsum("...nd,dh->...nh", chunk, w1[ci].astype(compute_dtype),
                       preferred_element_type=jnp.float32) + b1[ci]
        h = h * jax.nn.sigmoid(h)
        y = jnp.einsum("...nh,hd->...nd", h.astype(compute_dtype),
                       w2[ci].astype(compute_dtype),
                       preferred_element_type=jnp.float32) + b2[ci]
        outs.append(y)
        off += cs
    return jnp.concatenate(outs, axis=-2).astype(x.dtype)


def _run_case(key, lead, d, H, chunk_sizes, compute_dtype, atol, rtol):
    N = sum(chunk_sizes)
    C = len(chunk_sizes)
    kx, k1, k2, k3, k4 = jax.random.split(key, 5)
    x = jax.random.normal(kx, (*lead, N, d), dtype=jnp.float32)
    w1 = jax.random.normal(k1, (C, d, H), dtype=jnp.float32) * 0.1
    b1 = jax.random.normal(k2, (C, H), dtype=jnp.float32) * 0.1
    w2 = jax.random.normal(k3, (C, H, d), dtype=jnp.float32) * 0.1
    b2 = jax.random.normal(k4, (C, d), dtype=jnp.float32) * 0.1

    out = split_mlps(x, chunk_sizes, w1, b1, w2, b2,
                     compute_dtype=compute_dtype)
    out = jax.block_until_ready(out)
    ref = _reference(x, chunk_sizes, w1, b1, w2, b2,
                     compute_dtype=compute_dtype)
    assert out.shape == x.shape, (out.shape, x.shape)
    err = float(jnp.max(jnp.abs(out - ref)))
    assert jnp.allclose(out, ref, atol=atol, rtol=rtol), (
        f"mismatch: max abs diff = {err}")


if __name__ == "__main__":
    key = jax.random.PRNGKey(0)
    k_a, k_b, k_c = jax.random.split(key, 3)

    # Case 1: exact f32 path, ragged chunks + d < 128 -> chunk-major repack,
    # no HBM feature-pad of x, lane-dense dp=128 output.
    _run_case(k_a, lead=(2,), d=64, H=96, chunk_sizes=[160, 96, 256],
              compute_dtype=jnp.float32, atol=1e-4, rtol=1e-4)

    # Case 2: bf16 compute path, 256-aligned chunks -> zero-copy row view.
    _run_case(k_b, lead=(2,), d=128, H=256, chunk_sizes=[256, 512],
              compute_dtype=jnp.bfloat16, atol=5e-3, rtol=5e-3)

    # Case 3: no leading batch dims, tiny ragged chunks, bf16 path.
    _run_case(k_c, lead=(), d=32, H=64, chunk_sizes=[200, 56],
              compute_dtype=jnp.bfloat16, atol=5e-3, rtol=5e-3)

    print("KERNEL_OK")
</pallas_src>

<mosaic_0001>
module attributes {stable_mosaic.version = 11 : i64} {
  func.func @_split_mlp_kernel(%arg0: i32, %arg1: memref<5xi32, #tpu.memory_space<smem>>, %arg2: memref<256x64xf32, #tpu.memory_space<vmem>>, %arg3: memref<1x64x128xf32, #tpu.memory_space<vmem>>, %arg4: memref<1x1x128xf32, #tpu.memory_space<vmem>>, %arg5: memref<1x128x128xf32, #tpu.memory_space<vmem>>, %arg6: memref<1x1x128xf32, #tpu.memory_space<vmem>>, %arg7: memref<256x128xf32, #tpu.memory_space<vmem>>) attributes {dimension_semantics = [#tpu.dimension_semantics<parallel>], iteration_bounds = array<i64: 5>, scalar_prefetch = 1 : i64, scratch_operands = 0 : i64, tpu.core_type = #tpu.core_type<tc>, window_params = [{transform_indices = @transform_0, window_bounds = array<i64: 256, 64>}, {pipeline_mode = #tpu.pipeline_mode<synchronous>, transform_indices = @transform_1, window_bounds = array<i64: 1, 64, 128>}, {pipeline_mode = #tpu.pipeline_mode<synchronous>, transform_indices = @transform_2, window_bounds = array<i64: 1, 1, 128>}, {pipeline_mode = #tpu.pipeline_mode<synchronous>, transform_indices = @transform_3, window_bounds = array<i64: 1, 128, 128>}, {pipeline_mode = #tpu.pipeline_mode<synchronous>, transform_indices = @transform_4, window_bounds = array<i64: 1, 1, 128>}, {transform_indices = @transform_5, window_bounds = array<i64: 256, 128>}]} {
    %c0 = arith.constant 0 : index
    %c0_0 = arith.constant 0 : index
    %0 = vector.load %arg2[%c0, %c0_0] : memref<256x64xf32, #tpu.memory_space<vmem>>, vector<256x64xf32>
    %c0_1 = arith.constant 0 : index
    %c0_2 = arith.constant 0 : index
    %c0_3 = arith.constant 0 : index
    %1 = vector.load %arg3[%c0_1, %c0_2, %c0_3] : memref<1x64x128xf32, #tpu.memory_space<vmem>>, vector<1x64x128xf32>
    %2 = vector.shape_cast %1 : vector<1x64x128xf32> to vector<64x128xf32>
    %cst = arith.constant dense<0.000000e+00> : vector<256x128xf32>
    %3 = tpu.matmul %0, %2, %cst {dimension_numbers = #tpu.dot_dimension_numbers<[1], [0], [0], [1], [0, 0, 1, 1], [], []>} : vector<256x64xf32>, vector<64x128xf32>, vector<256x128xf32> -> vector<256x128xf32>
    %c0_4 = arith.constant 0 : index
    %c0_5 = arith.constant 0 : index
    %c0_6 = arith.constant 0 : index
    %4 = vector.load %arg4[%c0_4, %c0_5, %c0_6] : memref<1x1x128xf32, #tpu.memory_space<vmem>>, vector<1x1x128xf32>
    %5 = vector.shape_cast %4 : vector<1x1x128xf32> to vector<1x128xf32>
    %6 = vector.broadcast %5 : vector<1x128xf32> to vector<256x128xf32>
    %7 = arith.addf %3, %6 : vector<256x128xf32>
    %8 = arith.negf %7 : vector<256x128xf32>
    %9 = math.exp %8 : vector<256x128xf32>
    %cst_7 = arith.constant 1.000000e+00 : f32
    %10 = vector.broadcast %cst_7 : f32 to vector<256x128xf32>
    %11 = arith.addf %10, %9 : vector<256x128xf32>
    %12 = arith.divf %10, %11 : vector<256x128xf32>
    %13 = arith.mulf %7, %12 : vector<256x128xf32>
    %c0_8 = arith.constant 0 : index
    %c0_9 = arith.constant 0 : index
    %c0_10 = arith.constant 0 : index
    %14 = vector.load %arg5[%c0_8, %c0_9, %c0_10] : memref<1x128x128xf32, #tpu.memory_space<vmem>>, vector<1x128x128xf32>
    %15 = vector.shape_cast %14 : vector<1x128x128xf32> to vector<128x128xf32>
    %cst_11 = arith.constant dense<0.000000e+00> : vector<256x128xf32>
    %16 = tpu.matmul %13, %15, %cst_11 {dimension_numbers = #tpu.dot_dimension_numbers<[1], [0], [0], [1], [0, 0, 1, 1], [], []>} : vector<256x128xf32>, vector<128x128xf32>, vector<256x128xf32> -> vector<256x128xf32>
    %c0_12 = arith.constant 0 : index
    %c0_13 = arith.constant 0 : index
    %c0_14 = arith.constant 0 : index
    %17 = vector.load %arg6[%c0_12, %c0_13, %c0_14] : memref<1x1x128xf32, #tpu.memory_space<vmem>>, vector<1x1x128xf32>
    %18 = vector.shape_cast %17 : vector<1x1x128xf32> to vector<1x128xf32>
    %19 = vector.broadcast %18 : vector<1x128xf32> to vector<256x128xf32>
    %20 = arith.addf %16, %19 : vector<256x128xf32>
    %c0_15 = arith.constant 0 : index
    %c0_16 = arith.constant 0 : index
    %21 = vector.load %arg7[%c0_15, %c0_16] : memref<256x128xf32, #tpu.memory_space<vmem>>, vector<256x128xf32>
    tpu.vector_store %arg7[%c0_15, %c0_16], %20 {strides = array<i32>} : memref<256x128xf32, #tpu.memory_space<vmem>>, vector<256x128xf32>,
    return
  }
  func.func @transform_0(%arg0: i32, %arg1: memref<5xi32, #tpu.memory_space<smem>>) -> (i32, i32) {
    %c0_i32 = arith.constant 0 : i32
    %c0_i32_0 = arith.constant 0 : i32
    return %arg0, %c0_i32 : i32, i32
  }
  func.func @transform_1(%arg0: i32, %arg1: memref<5xi32, #tpu.memory_space<smem>>) -> (i32, i32, i32) {
    %0 = arith.index_cast %arg0 : i32 to index
    %1 = memref.load %arg1[%0] : memref<5xi32, #tpu.memory_space<smem>>
    %c0_i32 = arith.constant 0 : i32
    %c0_i32_0 = arith.constant 0 : i32
    %c0_i32_1 = arith.constant 0 : i32
    return %1, %c0_i32, %c0_i32_0 : i32, i32, i32
  }
  func.func @transform_2(%arg0: i32, %arg1: memref<5xi32, #tpu.memory_space<smem>>) -> (i32, i32, i32) {
    %0 = arith.index_cast %arg0 : i32 to index
    %1 = memref.load %arg1[%0] : memref<5xi32, #tpu.memory_space<smem>>
    %c0_i32 = arith.constant 0 : i32
    %c0_i32_0 = arith.constant 0 : i32
    %c0_i32_1 = arith.constant 0 : i32
    return %1, %c0_i32, %c0_i32_0 : i32, i32, i32
  }
  func.func @transform_3(%arg0: i32, %arg1: memref<5xi32, #tpu.memory_space<smem>>) -> (i32, i32, i32) {
    %0 = arith.index_cast %arg0 : i32 to index
    %1 = memref.load %arg1[%0] : memref<5xi32, #tpu.memory_space<smem>>
    %c0_i32 = arith.constant 0 : i32
    %c0_i32_0 = arith.constant 0 : i32
    %c0_i32_1 = arith.constant 0 : i32
    return %1, %c0_i32, %c0_i32_0 : i32, i32, i32
  }
  func.func @transform_4(%arg0: i32, %arg1: memref<5xi32, #tpu.memory_space<smem>>) -> (i32, i32, i32) {
    %0 = arith.index_cast %arg0 : i32 to index
    %1 = memref.load %arg1[%0] : memref<5xi32, #tpu.memory_space<smem>>
    %c0_i32 = arith.constant 0 : i32
    %c0_i32_0 = arith.constant 0 : i32
    %c0_i32_1 = arith.constant 0 : i32
    return %1, %c0_i32, %c0_i32_0 : i32, i32, i32
  }
  func.func @transform_5(%arg0: i32, %arg1: memref<5xi32, #tpu.memory_space<smem>>) -> (i32, i32) {
    %c0_i32 = arith.constant 0 : i32
    %c0_i32_0 = arith.constant 0 : i32
    return %arg0, %c0_i32 : i32, i32
  }
}

module attributes {stable_mosaic.version = 11 : i64} {
  func.func @_split_mlp_kernel(%arg0: i32, %arg1: memref<5xi32, #tpu.memory_space<smem>>, %arg2: memref<256x64xf32, #tpu.memory_space<vmem>>, %arg3: memref<1x64x128xf32, #tpu.memory_space<vmem>>, %arg4: memref<1x1x128xf32, #tpu.memory_space<vmem>>, %arg5: memref<1x128x128xf32, #tpu.memory_space<vmem>>, %arg6: memref<1x1x128xf32, #tpu.memory_space<vmem>>, %arg7: memref<256x128xf32, #tpu.memory_space<vmem>>) attributes {dimension_semantics = [#tpu.dimension_semantics<parallel>], iteration_bounds = array<i64: 5>, scalar_prefetch = 1 : i64, scratch_operands = 0 : i64, tpu.core_type = #tpu.core_type<tc>, window_params = [{transform_indices = @transform_0, window_bounds = array<i64: 256, 64>}, {transform_indices = @transform_1, window_bounds = array<i64: 1, 64, 128>}, {transform_indices = @transform_2, window_bounds = array<i64: 1, 1, 128>}, {transform_indices = @transform_3, window_bounds = array<i64: 1, 128, 128>}, {transform_indices = @transform_4, window_bounds = array<i64: 1, 1, 128>}, {transform_indices = @transform_5, window_bounds = array<i64: 256, 128>}]} {
    %c0 = arith.constant 0 : index
    %c0_0 = arith.constant 0 : index
    %0 = vector.load %arg2[%c0, %c0_0] : memref<256x64xf32, #tpu.memory_space<vmem>>, vector<256x64xf32>
    %c0_1 = arith.constant 0 : index
    %c0_2 = arith.constant 0 : index
    %c0_3 = arith.constant 0 : index
    %1 = vector.load %arg3[%c0_1, %c0_2, %c0_3] : memref<1x64x128xf32, #tpu.memory_space<vmem>>, vector<1x64x128xf32>
    %2 = vector.shape_cast %1 : vector<1x64x128xf32> to vector<64x128xf32>
    %cst = arith.constant dense<0.000000e+00> : vector<256x128xf32>
    %3 = tpu.matmul %0, %2, %cst {dimension_numbers = #tpu.dot_dimension_numbers<[1], [0], [0], [1], [0, 0, 1, 1], [], []>} : vector<256x64xf32>, vector<64x128xf32>, vector<256x128xf32> -> vector<256x128xf32>
    %c0_4 = arith.constant 0 : index
    %c0_5 = arith.constant 0 : index
    %c0_6 = arith.constant 0 : index
    %4 = vector.load %arg4[%c0_4, %c0_5, %c0_6] : memref<1x1x128xf32, #tpu.memory_space<vmem>>, vector<1x1x128xf32>
    %5 = vector.shape_cast %4 : vector<1x1x128xf32> to vector<1x128xf32>
    %6 = vector.broadcast %5 : vector<1x128xf32> to vector<256x128xf32>
    %7 = arith.addf %3, %6 : vector<256x128xf32>
    %8 = arith.negf %7 : vector<256x128xf32>
    %9 = math.exp %8 : vector<256x128xf32>
    %cst_7 = arith.constant 1.000000e+00 : f32
    %10 = vector.broadcast %cst_7 : f32 to vector<256x128xf32>
    %11 = arith.addf %10, %9 : vector<256x128xf32>
    %12 = arith.divf %10, %11 : vector<256x128xf32>
    %13 = arith.mulf %7, %12 : vector<256x128xf32>
    %c0_8 = arith.constant 0 : index
    %c0_9 = arith.constant 0 : index
    %c0_10 = arith.constant 0 : index
    %14 = vector.load %arg5[%c0_8, %c0_9, %c0_10] : memref<1x128x128xf32, #tpu.memory_space<vmem>>, vector<1x128x128xf32>
    %15 = vector.shape_cast %14 : vector<1x128x128xf32> to vector<128x128xf32>
    %cst_11 = arith.constant dense<0.000000e+00> : vector<256x128xf32>
    %16 = tpu.matmul %13, %15, %cst_11 {dimension_numbers = #tpu.dot_dimension_numbers<[1], [0], [0], [1], [0, 0, 1, 1], [], []>} : vector<256x128xf32>, vector<128x128xf32>, vector<256x128xf32> -> vector<256x128xf32>
    %c0_12 = arith.constant 0 : index
    %c0_13 = arith.constant 0 : index
    %c0_14 = arith.constant 0 : index
    %17 = vector.load %arg6[%c0_12, %c0_13, %c0_14] : memref<1x1x128xf32, #tpu.memory_space<vmem>>, vector<1x1x128xf32>
    %18 = vector.shape_cast %17 : vector<1x1x128xf32> to vector<1x128xf32>
    %19 = vector.broadcast %18 : vector<1x128xf32> to vector<256x128xf32>
    %20 = arith.addf %16, %19 : vector<256x128xf32>
    %c0_15 = arith.constant 0 : index
    %c0_16 = arith.constant 0 : index
    %21 = vector.load %arg7[%c0_15, %c0_16] : memref<256x128xf32, #tpu.memory_space<vmem>>, vector<256x128xf32>
    tpu.vector_store %arg7[%c0_15, %c0_16], %20 {strides = array<i32>} : memref<256x128xf32, #tpu.memory_space<vmem>>, vector<256x128xf32>,
    return
  }
  func.func @transform_0(%arg0: i32, %arg1: memref<5xi32, #tpu.memory_space<smem>>) -> (i32, i32) {
    %c0_i32 = arith.constant 0 : i32
    %c0_i32_0 = arith.constant 0 : i32
    return %arg0, %c0_i32 : i32, i32
  }
  func.func @transform_1(%arg0: i32, %arg1: memref<5xi32, #tpu.memory_space<smem>>) -> (i32, i32, i32) {
    %0 = arith.index_cast %arg0 : i32 to index
    %1 = memref.load %arg1[%0] : memref<5xi32, #tpu.memory_space<smem>>
    %c0_i32 = arith.constant 0 : i32
    %c0_i32_0 = arith.constant 0 : i32
    %c0_i32_1 = arith.constant 0 : i32
    return %1, %c0_i32, %c0_i32_0 : i32, i32, i32
  }
  func.func @transform_2(%arg0: i32, %arg1: memref<5xi32, #tpu.memory_space<smem>>) -> (i32, i32, i32) {
    %0 = arith.index_cast %arg0 : i32 to index
    %1 = memref.load %arg1[%0] : memref<5xi32, #tpu.memory_space<smem>>
    %c0_i32 = arith.constant 0 : i32
    %c0_i32_0 = arith.constant 0 : i32
    %c0_i32_1 = arith.constant 0 : i32
    return %1, %c0_i32, %c0_i32_0 : i32, i32, i32
  }
  func.func @transform_3(%arg0: i32, %arg1: memref<5xi32, #tpu.memory_space<smem>>) -> (i32, i32, i32) {
    %0 = arith.index_cast %arg0 : i32 to index
    %1 = memref.load %arg1[%0] : memref<5xi32, #tpu.memory_space<smem>>
    %c0_i32 = arith.constant 0 : i32
    %c0_i32_0 = arith.constant 0 : i32
    %c0_i32_1 = arith.constant 0 : i32
    return %1, %c0_i32, %c0_i32_0 : i32, i32, i32
  }
  func.func @transform_4(%arg0: i32, %arg1: memref<5xi32, #tpu.memory_space<smem>>) -> (i32, i32, i32) {
    %0 = arith.index_cast %arg0 : i32 to index
    %1 = memref.load %arg1[%0] : memref<5xi32, #tpu.memory_space<smem>>
    %c0_i32 = arith.constant 0 : i32
    %c0_i32_0 = arith.constant 0 : i32
    %c0_i32_1 = arith.constant 0 : i32
    return %1, %c0_i32, %c0_i32_0 : i32, i32, i32
  }
  func.func @transform_5(%arg0: i32, %arg1: memref<5xi32, #tpu.memory_space<smem>>) -> (i32, i32) {
    %c0_i32 = arith.constant 0 : i32
    %c0_i32_0 = arith.constant 0 : i32
    return %arg0, %c0_i32 : i32, i32
  }
}

</mosaic_0001>

<llo_original>
// kernel: tpu_custom_call.1
$region0: #{tpu_custom_call.1}
  #allocation0 [shape = 'u32[]', space=smem, size = 0x4, offset = 0x4, fixed_abs, tag = 'smem constant byte address 0x4 - core index']
  #allocation1 [shape = 'u32[144,128]{1,0:T(1,128)}', space=vmem, size = 0x12000, scoped, tag = 'internal scratch']
  #allocation2 [shape = 's32[1]{0}', space=sflag, size = 0x4, scoped, tag = 'scoped memory for tpu_custom_call.1']
  #allocation3 [shape = 'u8[512]{0}', space=smem, size = 0x200, scoped, tag = 'prefetched SMEM operand 0']
  %s0 = inlined_call_operand.vmem [shape: s32[5], index: 0, kind: input, shape index: {}]
  %s1 = inlined_call_operand.vmem [shape: f32[1280,64], index: 1, kind: input, shape index: {}]
  %s2 = inlined_call_operand.vmem [shape: f32[3,64,128], index: 2, kind: input, shape index: {}]
  %s3 = inlined_call_operand.vmem [shape: f32[3,1,128], index: 3, kind: input, shape index: {}]
  %s4 = inlined_call_operand.vmem [shape: f32[3,128,128], index: 4, kind: input, shape index: {}]
  %s5 = inlined_call_operand.vmem [shape: f32[3,1,128], index: 5, kind: input, shape index: {}]
  %s6 = inlined_call_operand.hbm [shape: f32[1280,128], index: 6, kind: output, shape index: {}]
  %s7 = sld [smem:[#allocation0]]
  $region53: #{tpu_custom_call.1} parent=0
    _
  %s9 = ssub.s32 1, %s7
  %s10 = scalar_select 0, %s9, %s7
  %s11 = sshll.u32 %s0, 4
  %s12 = int_to_ptr.vmem [resolvable:$true] %s11
  %14 = dma.vmem_to_smem %s12, 16, [#allocation3], [#allocation2]
  %15 = dma.done [#allocation2], 16
  %16 = sfence
  $region1: #{tpu_custom_call.1} parent=0
    #allocation4 [shape = 'u8[262144]{0}', space=vmem, size = 0x40000, scoped, tag = 'output window, operand 0']
    #allocation5 [shape = 's32[2]{0}', space=sflag, size = 0x8, scoped, tag = 'scoped memory for tpu_custom_call.1']
    %17 = vsyncpa [#allocation5], 0
    %s18 = scalar_lea.sflag [#allocation5], 1
    %19 = vsyncpa %s18, 0
    loop: start=0, step=1, limit=7
    $region2: #{tpu_custom_call.1} parent=1 // loop_pre_header
      _
    $region3: #{tpu_custom_call.1} parent=1 // loop_header
      %s21 = sphi 0, %s25
      %p22 = scmp.ge.s32.totalorder %s21, 7
      %s31 = sphi 0, %s33
      %s34 = sphi 0, %s31
      %s35 = sphi 0, %s34
      %s51 = sphi 0, %s35
      %s59 = sphi 0, %s61
      %s62 = sphi 0, %s59
      %s63 = sphi 0, %s62
      %s79 = sphi 0, %s63
      %s87 = sphi 0, %s89
      %s90 = sphi 0, %s87
      %s91 = sphi 0, %s90
      %s107 = sphi 0, %s91
      %s115 = sphi 0, %s117
      %s118 = sphi 0, %s115
      %s119 = sphi 0, %s118
      %s135 = sphi 0, %s119
      %s143 = sphi 0, %s145
      %s146 = sphi 0, %s143
      %s147 = sphi 0, %s146
      %s163 = sphi 0, %s147
      %s169 = sphi 0, %s171
      %s172 = sphi 0, %s169
      %s173 = sphi 0, %s172
      %s189 = sphi 0, %s173
    $region4: #{tpu_custom_call.1} parent=1 // loop_header_branch
      %24 = sbr.rel (%p22) target = $region8
    $region5: #{tpu_custom_call.1} parent=1 // loop_body
      %s26 = ssub.s32 %s21, 1
      %s27 = ssub.s32 %s21, 2
      %s28 = sadd.s32 %s21, 1
      %s29 = ssub.s32 %s21, %s28
      %p30 = scmp.eq.s32.totalorder %s29, 0
      %s32 = sadd.s32 %s31, 1
      %s33 = scalar_select %p30, %s31, %s32
      %p36 = pneg %p30
      %p37 = scmp.eq.s32.totalorder %s21, 4
      %p38 = por %p36, %p37
      %p39 = scmp.ne.s32.totalorder %s31, %s34
      %p40 = scmp.eq.s32.totalorder %s21, 0
      %p41 = por %p39, %p40
      %p42 = scmp.ne.s32.totalorder %s31, %s34
      %p43 = scmp.eq.s32.totalorder %s26, 4
      %p44 = por %p42, %p43
      %p45 = scmp.ne.s32.totalorder %s34, %s35
      %p46 = scmp.eq.s32.totalorder %s26, 0
      %p47 = por %p45, %p46
      %p48 = scmp.ne.s32.totalorder %s34, %s35
      %p49 = scmp.eq.s32.totalorder %s27, 4
      %p50 = por %p48, %p49
      %p52 = scmp.ne.s32.totalorder %s35, %s51
      %p53 = scmp.eq.s32.totalorder %s27, 0
      %p54 = por %p52, %p53
      %s55 = sld [smem:[#allocation3 + %s21]]
      %s56 = sld [smem:[#allocation3 + %s28]]
      %s57 = ssub.s32 %s55, %s56
      %p58 = scmp.eq.s32.totalorder %s57, 0
      %s60 = sadd.s32 %s59, 1
      %s61 = scalar_select %p58, %s59, %s60
      %p64 = pneg %p58
      %p65 = scmp.eq.s32.totalorder %s21, 4
      %p66 = por %p64, %p65
      %p67 = scmp.ne.s32.totalorder %s59, %s62
      %p68 = scmp.eq.s32.totalorder %s21, 0
      %p69 = por %p67, %p68
      %p70 = scmp.ne.s32.totalorder %s59, %s62
      %p71 = scmp.eq.s32.totalorder %s26, 4
      %p72 = por %p70, %p71
      %p73 = scmp.ne.s32.totalorder %s62, %s63
      %p74 = scmp.eq.s32.totalorder %s26, 0
      %p75 = por %p73, %p74
      %p76 = scmp.ne.s32.totalorder %s62, %s63
      %p77 = scmp.eq.s32.totalorder %s27, 4
      %p78 = por %p76, %p77
      %p80 = scmp.ne.s32.totalorder %s63, %s79
      %p81 = scmp.eq.s32.totalorder %s27, 0
      %p82 = por %p80, %p81
      %s83 = sld [smem:[#allocation3 + %s21]]
      %s84 = sld [smem:[#allocation3 + %s28]]
      %s85 = ssub.s32 %s83, %s84
      %p86 = scmp.eq.s32.totalorder %s85, 0
      %s88 = sadd.s32 %s87, 1
      %s89 = scalar_select %p86, %s87, %s88
      %p92 = pneg %p86
      %p93 = scmp.eq.s32.totalorder %s21, 4
      %p94 = por %p92, %p93
      %p95 = scmp.ne.s32.totalorder %s87, %s90
      %p96 = scmp.eq.s32.totalorder %s21, 0
      %p97 = por %p95, %p96
      %p98 = scmp.ne.s32.totalorder %s87, %s90
      %p99 = scmp.eq.s32.totalorder %s26, 4
      %p100 = por %p98, %p99
      %p101 = scmp.ne.s32.totalorder %s90, %s91
      %p102 = scmp.eq.s32.totalorder %s26, 0
      %p103 = por %p101, %p102
      %p104 = scmp.ne.s32.totalorder %s90, %s91
      %p105 = scmp.eq.s32.totalorder %s27, 4
      %p106 = por %p104, %p105
      %p108 = scmp.ne.s32.totalorder %s91, %s107
      %p109 = scmp.eq.s32.totalorder %s27, 0
      %p110 = por %p108, %p109
      %s111 = sld [smem:[#allocation3 + %s21]]
      %s112 = sld [smem:[#allocation3 + %s28]]
      %s113 = ssub.s32 %s111, %s112
      %p114 = scmp.eq.s32.totalorder %s113, 0
      %s116 = sadd.s32 %s115, 1
      %s117 = scalar_select %p114, %s115, %s116
      %p120 = pneg %p114
      %p121 = scmp.eq.s32.totalorder %s21, 4
      %p122 = por %p120, %p121
      %p123 = scmp.ne.s32.totalorder %s115, %s118
      %p124 = scmp.eq.s32.totalorder %s21, 0
      %p125 = por %p123, %p124
      %p126 = scmp.ne.s32.totalorder %s115, %s118
      %p127 = scmp.eq.s32.totalorder %s26, 4
      %p128 = por %p126, %p127
      %p129 = scmp.ne.s32.totalorder %s118, %s119
      %p130 = scmp.eq.s32.totalorder %s26, 0
      %p131 = por %p129, %p130
      %p132 = scmp.ne.s32.totalorder %s118, %s119
      %p133 = scmp.eq.s32.totalorder %s27, 4
      %p134 = por %p132, %p133
      %p136 = scmp.ne.s32.totalorder %s119, %s135
      %p137 = scmp.eq.s32.totalorder %s27, 0
      %p138 = por %p136, %p137
      %s139 = sld [smem:[#allocation3 + %s21]]
      %s140 = sld [smem:[#allocation3 + %s28]]
      %s141 = ssub.s32 %s139, %s140
      %p142 = scmp.eq.s32.totalorder %s141, 0
      %s144 = sadd.s32 %s143, 1
      %s145 = scalar_select %p142, %s143, %s144
      %p148 = pneg %p142
      %p149 = scmp.eq.s32.totalorder %s21, 4
      %p150 = por %p148, %p149
      %p151 = scmp.ne.s32.totalorder %s143, %s146
      %p152 = scmp.eq.s32.totalorder %s21, 0
      %p153 = por %p151, %p152
      %p154 = scmp.ne.s32.totalorder %s143, %s146
      %p155 = scmp.eq.s32.totalorder %s26, 4
      %p156 = por %p154, %p155
      %p157 = scmp.ne.s32.totalorder %s146, %s147
      %p158 = scmp.eq.s32.totalorder %s26, 0
      %p159 = por %p157, %p158
      %p160 = scmp.ne.s32.totalorder %s146, %s147
      %p161 = scmp.eq.s32.totalorder %s27, 4
      %p162 = por %p160, %p161
      %p164 = scmp.ne.s32.totalorder %s147, %s163
      %p165 = scmp.eq.s32.totalorder %s27, 0
      %p166 = por %p164, %p165
      %s167 = ssub.s32 %s21, %s28
      %p168 = scmp.eq.s32.totalorder %s167, 0
      %s170 = sadd.s32 %s169, 1
      %s171 = scalar_select %p168, %s169, %s170
      %p174 = pneg %p168
      %p175 = scmp.eq.s32.totalorder %s21, 4
      %p176 = por %p174, %p175
      %p177 = scmp.ne.s32.totalorder %s169, %s172
      %p178 = scmp.eq.s32.totalorder %s21, 0
      %p179 = por %p177, %p178
      %p180 = scmp.ne.s32.totalorder %s169, %s172
      %p181 = scmp.eq.s32.totalorder %s26, 4
      %p182 = por %p180, %p181
      %p183 = scmp.ne.s32.totalorder %s172, %s173
      %p184 = scmp.eq.s32.totalorder %s26, 0
      %p185 = por %p183, %p184
      %p186 = scmp.ne.s32.totalorder %s172, %s173
      %p187 = scmp.eq.s32.totalorder %s27, 4
      %p188 = por %p186, %p187
      %p190 = scmp.ne.s32.totalorder %s173, %s189
      %p191 = scmp.eq.s32.totalorder %s27, 0
      %p192 = por %p190, %p191
      %p193 = scmp.le.s32.totalorder 1, %s21
      %p194 = scmp.lt.s32.totalorder %s21, 6
      %p195 = pnand %p193, %p194
      %p196 = pneg %p195
      // Predicated region
      $region9: #{tpu_custom_call.1} parent=5 // pred_check
        _
      $region10: #{tpu_custom_call.1} parent=5 // pred_check_branch
        %198 = sbr.rel (%p195) target = $region12
      $region11: #{tpu_custom_call.1} parent=5 // pred_region
        %s199 = ssub.s32 %s21, 1
        // Predicated region
        $region13: #{tpu_custom_call.1} parent=11 // pred_check
          %p200 = pneg %p75
        $region14: #{tpu_custom_call.1} parent=11 // pred_check_branch
          %202 = sbr.rel (%p200) target = $region16
        $region15: #{tpu_custom_call.1} parent=11 // pred_region
          %s203 = sld [smem:[#allocation3 + %s26]]
          %p204 = scmp.lt.s32.totalorder %s203, 2
          %s205 = scalar_select %p204, %s203, 2
          %s206 = smul.addr %s205, 8
          %s207 = smul.addr %s206, 8
          %s208 = scalar_lea.vmem %s2, %s207
          %s209 = sld [smem:[#allocation3 + %s26]]
        $region16: #{tpu_custom_call.1} parent=11 // pred_fallthru
          _
        // Predicated region
        $region17: #{tpu_custom_call.1} parent=11 // pred_check
          %p210 = pneg %p103
        $region18: #{tpu_custom_call.1} parent=11 // pred_check_branch
          %212 = sbr.rel (%p210) target = $region20
        $region19: #{tpu_custom_call.1} parent=11 // pred_region
          %s213 = sld [smem:[#allocation3 + %s26]]
          %p214 = scmp.lt.s32.totalorder %s213, 2
          %s215 = scalar_select %p214, %s213, 2
          %s216 = scalar_lea.vmem %s3, %s215
          %s217 = sld [smem:[#allocation3 + %s26]]
        $region20: #{tpu_custom_call.1} parent=11 // pred_fallthru
          _
        // Predicated region
        $region21: #{tpu_custom_call.1} parent=11 // pred_check
          %p218 = pneg %p131
        $region22: #{tpu_custom_call.1} parent=11 // pred_check_branch
          %220 = sbr.rel (%p218) target = $region24
        $region23: #{tpu_custom_call.1} parent=11 // pred_region
          %s221 = sld [smem:[#allocation3 + %s26]]
          %p222 = scmp.lt.s32.totalorder %s221, 2
          %s223 = scalar_select %p222, %s221, 2
          %s224 = smul.addr %s223, 16
          %s225 = smul.addr %s224, 8
          %s226 = scalar_lea.vmem %s4, %s225
          %s227 = sld [smem:[#allocation3 + %s26]]
        $region24: #{tpu_custom_call.1} parent=11 // pred_fallthru
          _
        // Predicated region
        $region25: #{tpu_custom_call.1} parent=11 // pred_check
          %p228 = pneg %p159
        $region26: #{tpu_custom_call.1} parent=11 // pred_check_branch
          %230 = sbr.rel (%p228) target = $region28
        $region27: #{tpu_custom_call.1} parent=11 // pred_region
          %s231 = sld [smem:[#allocation3 + %s26]]
          %p232 = scmp.lt.s32.totalorder %s231, 2
          %s233 = scalar_select %p232, %s231, 2
          %s234 = scalar_lea.vmem %s5, %s233
          %s235 = sld [smem:[#allocation3 + %s26]]
        $region28: #{tpu_custom_call.1} parent=11 // pred_fallthru
          _
      $region12: #{tpu_custom_call.1} parent=5 // pred_fallthru
        _
      %p236 = scmp.lt.s32.totalorder %s21, 5
      // Predicated region
      $region29: #{tpu_custom_call.1} parent=5 // pred_check
        %p237 = pneg %p236
      $region30: #{tpu_custom_call.1} parent=5 // pred_check_branch
        %239 = sbr.rel (%p237) target = $region32
      $region31: #{tpu_custom_call.1} parent=5 // pred_region
        // Predicated region
        $region33: #{tpu_custom_call.1} parent=31 // pred_check
          %p240 = pneg %p41
        $region34: #{tpu_custom_call.1} parent=31 // pred_check_branch
          %242 = sbr.rel (%p240) target = $region36
        $region35: #{tpu_custom_call.1} parent=31 // pred_region
          %s243 = smul.u32 32, %s21
          %p244 = scmp.lt.s32.totalorder %s243, 159
          %s245 = scalar_select %p244, %s243, 159
          %s246 = smul.addr %s245, 8
          %s247 = scalar_lea.vmem %s1, %s246
          %s248 = smul.u32 32, %s21
        $region36: #{tpu_custom_call.1} parent=31 // pred_fallthru
          _
      $region32: #{tpu_custom_call.1} parent=5 // pred_fallthru
        _
      %p249 = scmp.le.s32.totalorder 1, %s21
      %p250 = scmp.lt.s32.totalorder %s21, 6
      %p251 = pnand %p249, %p250
      %p252 = pneg %p251
      // Predicated region
      $region37: #{tpu_custom_call.1} parent=5 // pred_check
        _
      $region38: #{tpu_custom_call.1} parent=5 // pred_check_branch
        %254 = sbr.rel (%p251) target = $region40
      $region39: #{tpu_custom_call.1} parent=5 // pred_region
        %s255 = ssub.s32 %s21, 1
        %s256 = smul.u32 32, %s26
        %p257 = scmp.lt.s32.totalorder %s256, 159
        %s258 = scalar_select %p257, %s256, 159
        %s259 = smul.addr %s258, 8
        %s260 = scalar_lea.vmem %s1, %s259
        %p261 = pneg %p47
        %p262 = pneg %p44
        %s263 = sld [smem:[#allocation3 + %s26]]
        %p264 = scmp.lt.s32.totalorder %s263, 2
        %s265 = scalar_select %p264, %s263, 2
        %s266 = smul.addr %s265, 8
        %s267 = smul.addr %s266, 8
        %s268 = scalar_lea.vmem %s2, %s267
        %p269 = pneg %p75
        %p270 = pneg %p72
        %s271 = sld [smem:[#allocation3 + %s26]]
        %p272 = scmp.lt.s32.totalorder %s271, 2
        %s273 = scalar_select %p272, %s271, 2
        %s274 = scalar_lea.vmem %s3, %s273
        %p275 = pneg %p103
        %p276 = pneg %p100
        %s277 = sld [smem:[#allocation3 + %s26]]
        %p278 = scmp.lt.s32.totalorder %s277, 2
        %s279 = scalar_select %p278, %s277, 2
        %s280 = smul.addr %s279, 16
        %s281 = smul.addr %s280, 8
        %s282 = scalar_lea.vmem %s4, %s281
        %p283 = pneg %p131
        %p284 = pneg %p128
        %s285 = sld [smem:[#allocation3 + %s26]]
        %p286 = scmp.lt.s32.totalorder %s285, 2
        %s287 = scalar_select %p286, %s285, 2
        %s288 = scalar_lea.vmem %s5, %s287
        %p289 = pneg %p159
        %p290 = pneg %p156
        %p291 = pneg %p185
        %p292 = pneg %p182
        %s293 = sand.u32 %s172, 1
        %s294 = scalar_lea.sflag [#allocation5], %s293
        %s295 = sand.u32 %s172, 1
        %s296 = smul.addr %s295, 256
        %s297 = scalar_lea.vmem [#allocation4], %s296
        %s298 = smul.u32 32, %s26
        %p299 = scmp.lt.s32.totalorder %s298, 159
        %s300 = scalar_select %p299, %s298, 159
        %s301 = smul.addr %s300, 8
        %s302 = scalar_lea.vmem %s1, %s301
        %s303 = smul.u32 32, %s26
        %s304 = sld [smem:[#allocation3 + %s26]]
        %p305 = scmp.lt.s32.totalorder %s304, 2
        %s306 = scalar_select %p305, %s304, 2
        %s307 = smul.addr %s306, 8
        %s308 = smul.addr %s307, 8
        %s309 = scalar_lea.vmem %s2, %s308
        %s310 = sld [smem:[#allocation3 + %s26]]
        %s311 = sld [smem:[#allocation3 + %s26]]
        %p312 = scmp.lt.s32.totalorder %s311, 2
        %s313 = scalar_select %p312, %s311, 2
        %s314 = scalar_lea.vmem %s3, %s313
        %s315 = sld [smem:[#allocation3 + %s26]]
        %s316 = sld [smem:[#allocation3 + %s26]]
        %p317 = scmp.lt.s32.totalorder %s316, 2
        %s318 = scalar_select %p317, %s316, 2
        %s319 = smul.addr %s318, 16
        %s320 = smul.addr %s319, 8
        %s321 = scalar_lea.vmem %s4, %s320
        %s322 = sld [smem:[#allocation3 + %s26]]
        %s323 = sld [smem:[#allocation3 + %s26]]
        %p324 = scmp.lt.s32.totalorder %s323, 2
        %s325 = scalar_select %p324, %s323, 2
        %s326 = scalar_lea.vmem %s5, %s325
        %s327 = sld [smem:[#allocation3 + %s26]]
        %s328 = smul.u32 32, %s26
        %v329 = vld [vmem:[%s302] sm:$0xff]
        %v330 = vld [vmem:[%s302 + $0x8] sm:$0xff]
        %v331 = vld [vmem:[%s302 + $0x10] sm:$0xff]
        %v332 = vld [vmem:[%s302 + $0x18] sm:$0xff]
        %v333 = vld [vmem:[%s302 + $0x20] sm:$0xff]
        %v334 = vld [vmem:[%s302 + $0x28] sm:$0xff]
        %v335 = vld [vmem:[%s302 + $0x30] sm:$0xff]
        %v336 = vld [vmem:[%s302 + $0x38] sm:$0xff]
        %v337 = vld [vmem:[%s302 + $0x40] sm:$0xff]
        %v338 = vld [vmem:[%s302 + $0x48] sm:$0xff]
        %v339 = vld [vmem:[%s302 + $0x50] sm:$0xff]
        %v340 = vld [vmem:[%s302 + $0x58] sm:$0xff]
        %v341 = vld [vmem:[%s302 + $0x60] sm:$0xff]
        %v342 = vld [vmem:[%s302 + $0x68] sm:$0xff]
        %v343 = vld [vmem:[%s302 + $0x70] sm:$0xff]
        %v344 = vld [vmem:[%s302 + $0x78] sm:$0xff]
        %v345 = vld [vmem:[%s302 + $0x80] sm:$0xff]
        %v346 = vld [vmem:[%s302 + $0x88] sm:$0xff]
        %v347 = vld [vmem:[%s302 + $0x90] sm:$0xff]
        %v348 = vld [vmem:[%s302 + $0x98] sm:$0xff]
        %v349 = vld [vmem:[%s302 + $0xa0] sm:$0xff]
        %v350 = vld [vmem:[%s302 + $0xa8] sm:$0xff]
        %v351 = vld [vmem:[%s302 + $0xb0] sm:$0xff]
        %v352 = vld [vmem:[%s302 + $0xb8] sm:$0xff]
        %v353 = vld [vmem:[%s302 + $0xc0] sm:$0xff]
        %v354 = vld [vmem:[%s302 + $0xc8] sm:$0xff]
        %v355 = vld [vmem:[%s302 + $0xd0] sm:$0xff]
        %v356 = vld [vmem:[%s302 + $0xd8] sm:$0xff]
        %v357 = vld [vmem:[%s302 + $0xe0] sm:$0xff]
        %v358 = vld [vmem:[%s302 + $0xe8] sm:$0xff]
        %v359 = vld [vmem:[%s302 + $0xf0] sm:$0xff]
        %v360 = vld [vmem:[%s302 + $0xf8] sm:$0xff]
        %v361 = vld [vmem:[%s309] sm:$0xff]
        %v362 = vld [vmem:[%s309 + $0x8] sm:$0xff]
        %v363 = vld [vmem:[%s309 + $0x10] sm:$0xff]
        %v364 = vld [vmem:[%s309 + $0x18] sm:$0xff]
        %v365 = vld [vmem:[%s309 + $0x20] sm:$0xff]
        %v366 = vld [vmem:[%s309 + $0x28] sm:$0xff]
        %v367 = vld [vmem:[%s309 + $0x30] sm:$0xff]
        %v368 = vld [vmem:[%s309 + $0x38] sm:$0xff]
        %v369 = vld [vmem:[%s314] sm:$0x1]
        %v371 = vlaneseq
        %v372 = vshrl.u32 %v371, 7
        %v373 = vsub.s32 0, %v372
        %v374 = vrot.slane %v369, %v373
        %vm376 = vcmask 523264
        %v378 = vsel %vm376, %v329, 0
        %v381 = vsel %vm376, %v330, 0
        %v384 = vsel %vm376, %v331, 0
        %v387 = vsel %vm376, %v332, 0
        %v390 = vsel %vm376, %v333, 0
        %v393 = vsel %vm376, %v334, 0
        %v396 = vsel %vm376, %v335, 0
        %v399 = vsel %vm376, %v336, 0
        %v402 = vsel %vm376, %v337, 0
        %v405 = vsel %vm376, %v338, 0
        %v408 = vsel %vm376, %v339, 0
        %v411 = vsel %vm376, %v340, 0
        %v414 = vsel %vm376, %v341, 0
        %v417 = vsel %vm376, %v342, 0
        %v420 = vsel %vm376, %v343, 0
        %v423 = vsel %vm376, %v344, 0
        %v426 = vsel %vm376, %v345, 0
        %v429 = vsel %vm376, %v346, 0
        %v432 = vsel %vm376, %v347, 0
        %v435 = vsel %vm376, %v348, 0
        %v438 = vsel %vm376, %v349, 0
        %v441 = vsel %vm376, %v350, 0
        %v444 = vsel %vm376, %v351, 0
        %v447 = vsel %vm376, %v352, 0
        %v450 = vsel %vm376, %v353, 0
        %v453 = vsel %vm376, %v354, 0
        %v456 = vsel %vm376, %v355, 0
        %v459 = vsel %vm376, %v356, 0
        %v462 = vsel %vm376, %v357, 0
        %v465 = vsel %vm376, %v358, 0
        %v468 = vsel %vm376, %v359, 0
        %v471 = vsel %vm376, %v360, 0
        %473 = vmatprep.subr.mxu0 0.0
        %474 = vmatpush1.msra.mxu0 %v361
        %475 = vmatprep.subr.mxu0 0.0
        %476 = vmatpush1.msra.mxu0 %v362
        %477 = vmatprep.subr.mxu0 0.0
        %478 = vmatpush1.msra.mxu0 %v363
        %479 = vmatprep.subr.mxu0 0.0
        %480 = vmatpush1.msra.mxu0 %v364
        %481 = vmatprep.subr.mxu0 0.0
        %482 = vmatpush1.msra.mxu0 %v365
        %483 = vmatprep.subr.mxu0 0.0
        %484 = vmatpush1.msra.mxu0 %v366
        %485 = vmatprep.subr.mxu0 0.0
        %486 = vmatpush1.msra.mxu0 %v367
        %487 = vmatprep.subr.mxu0 0.0
        %488 = vmatpush1.msra.mxu0 %v368
        %489 = vmatprep.subr.mxu0 0.0
        %490 = vmatpush1.msra.mxu0 0.0
        %491 = vmatprep.subr.mxu0 0.0
        %492 = vmatpush1.msra.mxu0 0.0
        %493 = vmatprep.subr.mxu0 0.0
        %494 = vmatpush1.msra.mxu0 0.0
        %495 = vmatprep.subr.mxu0 0.0
        %496 = vmatpush1.msra.mxu0 0.0
        %497 = vmatprep.subr.mxu0 0.0
        %498 = vmatpush1.msra.mxu0 0.0
        %499 = vmatprep.subr.mxu0 0.0
        %500 = vmatpush1.msra.mxu0 0.0
        %501 = vmatprep.subr.mxu0 0.0
        %502 = vmatpush1.msra.mxu0 0.0
        %503 = vmatprep.subr.mxu0 0.0
        %504 = vmatpush1.msra.mxu0 0.0
        %505 = vmatprep.subr.mxu0 0.0
        %506 = vmatpush1.msra.mxu0 0.0
        %507 = vmatprep.subr.mxu0 0.0
        %508 = vmatpush1.msra.mxu0 0.0
        %509 = vmatprep.subr.mxu0 0.0
        %510 = vmatpush1.msra.mxu0 0.0
        %511 = vmatprep.subr.mxu0 0.0
        %512 = vmatpush1.msra.mxu0 0.0
        %513 = vmatprep.subr.mxu0 0.0
        %514 = vmatpush1.msra.mxu0 0.0
        %515 = vmatprep.subr.mxu0 0.0
        %516 = vmatpush1.msra.mxu0 0.0
        %517 = vmatprep.subr.mxu0 0.0
        %518 = vmatpush1.msra.mxu0 0.0
        %519 = vmatprep.subr.mxu0 0.0
        %520 = vmatpush1.msra.mxu0 0.0
        %521 = vmatprep.subr.mxu0 0.0
        %522 = vmatpush1.msra.mxu0 0.0
        %523 = vmatprep.subr.mxu0 0.0
        %524 = vmatpush1.msra.mxu0 0.0
        %525 = vmatprep.subr.mxu0 0.0
        %526 = vmatpush1.msra.mxu0 0.0
        %527 = vmatprep.subr.mxu0 0.0
        %528 = vmatpush1.msra.mxu0 0.0
        %529 = vmatprep.subr.mxu0 0.0
        %530 = vmatpush1.msra.mxu0 0.0
        %531 = vmatprep.subr.mxu0 0.0
        %532 = vmatpush1.msra.mxu0 0.0
        %533 = vmatprep.subr.mxu0 0.0
        %534 = vmatpush1.msra.mxu0 0.0
        %535 = vmatprep.subr.mxu0 0.0
        %536 = vmatpush1.msra.mxu0 0.0
        %537 = vmatprep.mubr.f32.mxu0 0.0
        %538 = vmatmul.mubr.f32.gmra.mrb[0].mxu0 %v378
        %v539 = vpop.f32.mrb[0].mxu0
        %v540 = vadd.f32 %v374, %v539
        %v541 = vpop.f32.mrb[0].mxu0
        %542 = vmatprep.mubr.f32.mxu0 0.0
        %543 = vmatmul.mubr.f32.gmra.mrb[0].mxu0 %v381
        %v544 = vpop.f32.mrb[0].mxu0
        %v545 = vadd.f32 %v374, %v544
        %v546 = vpop.f32.mrb[0].mxu0
        %547 = vmatprep.mubr.f32.mxu0 0.0
        %548 = vmatmul.mubr.f32.gmra.mrb[0].mxu0 %v384
        %v549 = vpop.f32.mrb[0].mxu0
        %v550 = vadd.f32 %v374, %v549
        %v551 = vpop.f32.mrb[0].mxu0
        %552 = vmatprep.mubr.f32.mxu0 0.0
        %553 = vmatmul.mubr.f32.gmra.mrb[0].mxu0 %v387
        %v554 = vpop.f32.mrb[0].mxu0
        %v555 = vadd.f32 %v374, %v554
        %v556 = vpop.f32.mrb[0].mxu0
        %557 = vmatprep.mubr.f32.mxu0 0.0
        %558 = vmatmul.mubr.f32.gmra.mrb[0].mxu0 %v390
        %v559 = vpop.f32.mrb[0].mxu0
        %v560 = vadd.f32 %v374, %v559
        %v561 = vpop.f32.mrb[0].mxu0
        %562 = vmatprep.mubr.f32.mxu0 0.0
        %563 = vmatmul.mubr.f32.gmra.mrb[0].mxu0 %v393
        %v564 = vpop.f32.mrb[0].mxu0
        %v565 = vadd.f32 %v374, %v564
        %v566 = vpop.f32.mrb[0].mxu0
        %567 = vmatprep.mubr.f32.mxu0 0.0
        %568 = vmatmul.mubr.f32.gmra.mrb[0].mxu0 %v396
        %v569 = vpop.f32.mrb[0].mxu0
        %v570 = vadd.f32 %v374, %v569
        %v571 = vpop.f32.mrb[0].mxu0
        %572 = vmatprep.mubr.f32.mxu0 0.0
        %573 = vmatmul.mubr.f32.gmra.mrb[0].mxu0 %v399
        %v574 = vpop.f32.mrb[0].mxu0
        %v575 = vadd.f32 %v374, %v574
        %v576 = vpop.f32.mrb[0].mxu0
        %577 = vmatprep.mubr.f32.mxu0 0.0
        %578 = vmatmul.mubr.f32.gmra.mrb[0].mxu0 %v402
        %v579 = vpop.f32.mrb[0].mxu0
        %v580 = vadd.f32 %v374, %v579
        %v581 = vpop.f32.mrb[0].mxu0
        %582 = vmatprep.mubr.f32.mxu0 0.0
        %583 = vmatmul.mubr.f32.gmra.mrb[0].mxu0 %v405
        %v584 = vpop.f32.mrb[0].mxu0
        %v585 = vadd.f32 %v374, %v584
        %v586 = vpop.f32.mrb[0].mxu0
        %587 = vmatprep.mubr.f32.mxu0 0.0
        %588 = vmatmul.mubr.f32.gmra.mrb[0].mxu0 %v408
        %v589 = vpop.f32.mrb[0].mxu0
        %v590 = vadd.f32 %v374, %v589
        %v591 = vpop.f32.mrb[0].mxu0
        %592 = vmatprep.mubr.f32.mxu0 0.0
        %593 = vmatmul.mubr.f32.gmra.mrb[0].mxu0 %v411
        %v594 = vpop.f32.mrb[0].mxu0
        %v595 = vadd.f32 %v374, %v594
        %v596 = vpop.f32.mrb[0].mxu0
        %597 = vmatprep.mubr.f32.mxu0 0.0
        %598 = vmatmul.mubr.f32.gmra.mrb[0].mxu0 %v414
        %v599 = vpop.f32.mrb[0].mxu0
        %v600 = vadd.f32 %v374, %v599
        %v601 = vpop.f32.mrb[0].mxu0
        %602 = vmatprep.mubr.f32.mxu0 0.0
        %603 = vmatmul.mubr.f32.gmra.mrb[0].mxu0 %v417
        %v604 = vpop.f32.mrb[0].mxu0
        %v605 = vadd.f32 %v374, %v604
        %v606 = vpop.f32.mrb[0].mxu0
        %607 = vmatprep.mubr.f32.mxu0 0.0
        %608 = vmatmul.mubr.f32.gmra.mrb[0].mxu0 %v420
        %v609 = vpop.f32.mrb[0].mxu0
        %v610 = vadd.f32 %v374, %v609
        %v611 = vpop.f32.mrb[0].mxu0
        %612 = vmatprep.mubr.f32.mxu0 0.0
        %613 = vmatmul.mubr.f32.gmra.mrb[0].mxu0 %v423
        %v614 = vpop.f32.mrb[0].mxu0
        %v615 = vadd.f32 %v374, %v614
        %v616 = vpop.f32.mrb[0].mxu0
        %617 = vmatprep.mubr.f32.mxu0 0.0
        %618 = vmatmul.mubr.f32.gmra.mrb[0].mxu0 %v426
        %v619 = vpop.f32.mrb[0].mxu0
        %v620 = vadd.f32 %v374, %v619
        %v621 = vpop.f32.mrb[0].mxu0
        %622 = vmatprep.mubr.f32.mxu0 0.0
        %623 = vmatmul.mubr.f32.gmra.mrb[0].mxu0 %v429
        %v624 = vpop.f32.mrb[0].mxu0
        %v625 = vadd.f32 %v374, %v624
        %v626 = vpop.f32.mrb[0].mxu0
        %627 = vmatprep.mubr.f32.mxu0 0.0
        %628 = vmatmul.mubr.f32.gmra.mrb[0].mxu0 %v432
        %v629 = vpop.f32.mrb[0].mxu0
        %v630 = vadd.f32 %v374, %v629
        %v631 = vpop.f32.mrb[0].mxu0
        %632 = vmatprep.mubr.f32.mxu0 0.0
        %633 = vmatmul.mubr.f32.gmra.mrb[0].mxu0 %v435
        %v634 = vpop.f32.mrb[0].mxu0
        %v635 = vadd.f32 %v374, %v634
        %v636 = vpop.f32.mrb[0].mxu0
        %637 = vmatprep.mubr.f32.mxu0 0.0
        %638 = vmatmul.mubr.f32.gmra.mrb[0].mxu0 %v438
        %v639 = vpop.f32.mrb[0].mxu0
        %v640 = vadd.f32 %v374, %v639
        %v641 = vpop.f32.mrb[0].mxu0
        %642 = vmatprep.mubr.f32.mxu0 0.0
        %643 = vmatmul.mubr.f32.gmra.mrb[0].mxu0 %v441
        %v644 = vpop.f32.mrb[0].mxu0
        %v645 = vadd.f32 %v374, %v644
        %v646 = vpop.f32.mrb[0].mxu0
        %647 = vmatprep.mubr.f32.mxu0 0.0
        %648 = vmatmul.mubr.f32.gmra.mrb[0].mxu0 %v444
        %v649 = vpop.f32.mrb[0].mxu0
        %v650 = vadd.f32 %v374, %v649
        %v651 = vpop.f32.mrb[0].mxu0
        %652 = vmatprep.mubr.f32.mxu0 0.0
        %653 = vmatmul.mubr.f32.gmra.mrb[0].mxu0 %v447
        %v654 = vpop.f32.mrb[0].mxu0
        %v655 = vadd.f32 %v374, %v654
        %v656 = vpop.f32.mrb[0].mxu0
        %657 = vmatprep.mubr.f32.mxu0 0.0
        %658 = vmatmul.mubr.f32.gmra.mrb[0].mxu0 %v450
        %v659 = vpop.f32.mrb[0].mxu0
        %v660 = vadd.f32 %v374, %v659
        %v661 = vpop.f32.mrb[0].mxu0
        %662 = vmatprep.mubr.f32.mxu0 0.0
        %663 = vmatmul.mubr.f32.gmra.mrb[0].mxu0 %v453
        %v664 = vpop.f32.mrb[0].mxu0
        %v665 = vadd.f32 %v374, %v664
        %v666 = vpop.f32.mrb[0].mxu0
        %667 = vmatprep.mubr.f32.mxu0 0.0
        %668 = vmatmul.mubr.f32.gmra.mrb[0].mxu0 %v456
        %v669 = vpop.f32.mrb[0].mxu0
        %v670 = vadd.f32 %v374, %v669
        %v671 = vpop.f32.mrb[0].mxu0
        %672 = vmatprep.mubr.f32.mxu0 0.0
        %673 = vmatmul.mubr.f32.gmra.mrb[0].mxu0 %v459
        %v674 = vpop.f32.mrb[0].mxu0
        %v675 = vadd.f32 %v374, %v674
        %v676 = vpop.f32.mrb[0].mxu0
        %677 = vmatprep.mubr.f32.mxu0 0.0
        %678 = vmatmul.mubr.f32.gmra.mrb[0].mxu0 %v462
        %v679 = vpop.f32.mrb[0].mxu0
        %v680 = vadd.f32 %v374, %v679
        %v681 = vpop.f32.mrb[0].mxu0
        %682 = vmatprep.mubr.f32.mxu0 0.0
        %683 = vmatmul.mubr.f32.gmra.mrb[0].mxu0 %v465
        %v684 = vpop.f32.mrb[0].mxu0
        %v685 = vadd.f32 %v374, %v684
        %v686 = vpop.f32.mrb[0].mxu0
        %687 = vmatprep.mubr.f32.mxu0 0.0
        %688 = vmatmul.mubr.f32.gmra.mrb[0].mxu0 %v468
        %v689 = vpop.f32.mrb[0].mxu0
        %v690 = vadd.f32 %v374, %v689
        %v691 = vpop.f32.mrb[0].mxu0
        %692 = vmatprep.mubr.f32.mxu0 0.0
        %693 = vmatmul.mubr.f32.gmra.mrb[0].mxu0 %v471
        %v694 = vpop.f32.mrb[0].mxu0
        %v695 = vadd.f32 %v374, %v694
        %v696 = vpop.f32.mrb[0].mxu0
        %697 = vdwg.mxu0
        %v698 = vxor.u32 %v540, 2147483648
        %v699 = vxor.u32 %v545, 2147483648
        %v700 = vxor.u32 %v550, 2147483648
        %v701 = vxor.u32 %v555, 2147483648
        %v702 = vxor.u32 %v560, 2147483648
        %v703 = vxor.u32 %v565, 2147483648
        %v704 = vxor.u32 %v570, 2147483648
        %v705 = vxor.u32 %v575, 2147483648
        %v706 = vxor.u32 %v580, 2147483648
        %v707 = vxor.u32 %v585, 2147483648
        %v708 = vxor.u32 %v590, 2147483648
        %v709 = vxor.u32 %v595, 2147483648
        %v710 = vxor.u32 %v600, 2147483648
        %v711 = vxor.u32 %v605, 2147483648
        %v712 = vxor.u32 %v610, 2147483648
        %v713 = vxor.u32 %v615, 2147483648
        %v714 = vxor.u32 %v620, 2147483648
        %v715 = vxor.u32 %v625, 2147483648
        %v716 = vxor.u32 %v630, 2147483648
        %v717 = vxor.u32 %v635, 2147483648
        %v718 = vxor.u32 %v640, 2147483648
        %v719 = vxor.u32 %v645, 2147483648
        %v720 = vxor.u32 %v650, 2147483648
        %v721 = vxor.u32 %v655, 2147483648
        %v722 = vxor.u32 %v660, 2147483648
        %v723 = vxor.u32 %v665, 2147483648
        %v724 = vxor.u32 %v670, 2147483648
        %v725 = vxor.u32 %v675, 2147483648
        %v726 = vxor.u32 %v680, 2147483648
        %v727 = vxor.u32 %v685, 2147483648
        %v728 = vxor.u32 %v690, 2147483648
        %v729 = vxor.u32 %v695, 2147483648
        %v730 = vmul.f32 %v698, 1.442695
        %v731 = vpow.pop %v730
        %v732 = vmul.f32 %v699, 1.442695
        %v733 = vpow.pop %v732
        %v734 = vmul.f32 %v700, 1.442695
        %v735 = vpow.pop %v734
        %v736 = vmul.f32 %v701, 1.442695
        %v737 = vpow.pop %v736
        %v738 = vmul.f32 %v702, 1.442695
        %v739 = vpow.pop %v738
        %v740 = vmul.f32 %v703, 1.442695
        %v741 = vpow.pop %v740
        %v742 = vmul.f32 %v704, 1.442695
        %v743 = vpow.pop %v742
        %v744 = vmul.f32 %v705, 1.442695
        %v745 = vpow.pop %v744
        %v746 = vmul.f32 %v706, 1.442695
        %v747 = vpow.pop %v746
        %v748 = vmul.f32 %v707, 1.442695
        %v749 = vpow.pop %v748
        %v750 = vmul.f32 %v708, 1.442695
        %v751 = vpow.pop %v750
        %v752 = vmul.f32 %v709, 1.442695
        %v753 = vpow.pop %v752
        %v754 = vmul.f32 %v710, 1.442695
        %v755 = vpow.pop %v754
        %v756 = vmul.f32 %v711, 1.442695
        %v757 = vpow.pop %v756
        %v758 = vmul.f32 %v712, 1.442695
        %v759 = vpow.pop %v758
        %v760 = vmul.f32 %v713, 1.442695
        %v761 = vpow.pop %v760
        %v762 = vmul.f32 %v714, 1.442695
        %v763 = vpow.pop %v762
        %v764 = vmul.f32 %v715, 1.442695
        %v765 = vpow.pop %v764
        %v766 = vmul.f32 %v716, 1.442695
        %v767 = vpow.pop %v766
        %v768 = vmul.f32 %v717, 1.442695
        %v769 = vpow.pop %v768
        %v770 = vmul.f32 %v718, 1.442695
        %v771 = vpow.pop %v770
        %v772 = vmul.f32 %v719, 1.442695
        %v773 = vpow.pop %v772
        %v774 = vmul.f32 %v720, 1.442695
        %v775 = vpow.pop %v774
        %v776 = vmul.f32 %v721, 1.442695
        %v777 = vpow.pop %v776
        %v778 = vmul.f32 %v722, 1.442695
        %v779 = vpow.pop %v778
        %v780 = vmul.f32 %v723, 1.442695
        %v781 = vpow.pop %v780
        %v782 = vmul.f32 %v724, 1.442695
        %v783 = vpow.pop %v782
        %v784 = vmul.f32 %v725, 1.442695
        %v785 = vpow.pop %v784
        %v786 = vmul.f32 %v726, 1.442695
        %v787 = vpow.pop %v786
        %v788 = vmul.f32 %v727, 1.442695
        %v789 = vpow.pop %v788
        %v790 = vmul.f32 %v728, 1.442695
        %v791 = vpow.pop %v790
        %v792 = vmul.f32 %v729, 1.442695
        %v793 = vpow.pop %v792
        %v794 = vadd.f32 %v731, 1.0
        %v795 = vadd.f32 %v733, 1.0
        %v796 = vadd.f32 %v735, 1.0
        %v797 = vadd.f32 %v737, 1.0
        %v798 = vadd.f32 %v739, 1.0
        %v799 = vadd.f32 %v741, 1.0
        %v800 = vadd.f32 %v743, 1.0
        %v801 = vadd.f32 %v745, 1.0
        %v802 = vadd.f32 %v747, 1.0
        %v803 = vadd.f32 %v749, 1.0
        %v804 = vadd.f32 %v751, 1.0
        %v805 = vadd.f32 %v753, 1.0
        %v806 = vadd.f32 %v755, 1.0
        %v807 = vadd.f32 %v757, 1.0
        %v808 = vadd.f32 %v759, 1.0
        %v809 = vadd.f32 %v761, 1.0
        %v810 = vadd.f32 %v763, 1.0
        %v811 = vadd.f32 %v765, 1.0
        %v812 = vadd.f32 %v767, 1.0
        %v813 = vadd.f32 %v769, 1.0
        %v814 = vadd.f32 %v771, 1.0
        %v815 = vadd.f32 %v773, 1.0
        %v816 = vadd.f32 %v775, 1.0
        %v817 = vadd.f32 %v777, 1.0
        %v818 = vadd.f32 %v779, 1.0
        %v819 = vadd.f32 %v781, 1.0
        %v820 = vadd.f32 %v783, 1.0
        %v821 = vadd.f32 %v785, 1.0
        %v822 = vadd.f32 %v787, 1.0
        %v823 = vadd.f32 %v789, 1.0
        %v824 = vadd.f32 %v791, 1.0
        %v825 = vadd.f32 %v793, 1.0
        %v826 = vrcp.pop %v794
        %v827 = vmul.f32 1.0, %v826
        %v828 = vrcp.pop %v795
        %v829 = vmul.f32 1.0, %v828
        %v830 = vrcp.pop %v796
        %v831 = vmul.f32 1.0, %v830
        %v832 = vrcp.pop %v797
        %v833 = vmul.f32 1.0, %v832
        %v834 = vrcp.pop %v798
        %v835 = vmul.f32 1.0, %v834
        %v836 = vrcp.pop %v799
        %v837 = vmul.f32 1.0, %v836
        %v838 = vrcp.pop %v800
        %v839 = vmul.f32 1.0, %v838
        %v840 = vrcp.pop %v801
        %v841 = vmul.f32 1.0, %v840
        %v842 = vrcp.pop %v802
        %v843 = vmul.f32 1.0, %v842
        %v844 = vrcp.pop %v803
        %v845 = vmul.f32 1.0, %v844
        %v846 = vrcp.pop %v804
        %v847 = vmul.f32 1.0, %v846
        %v848 = vrcp.pop %v805
        %v849 = vmul.f32 1.0, %v848
        %v850 = vrcp.pop %v806
        %v851 = vmul.f32 1.0, %v850
        %v852 = vrcp.pop %v807
        %v853 = vmul.f32 1.0, %v852
        %v854 = vrcp.pop %v808
        %v855 = vmul.f32 1.0, %v854
        %v856 = vrcp.pop %v809
        %v857 = vmul.f32 1.0, %v856
        %v858 = vrcp.pop %v810
        %v859 = vmul.f32 1.0, %v858
        %v860 = vrcp.pop %v811
        %v861 = vmul.f32 1.0, %v860
        %v862 = vrcp.pop %v812
        %v863 = vmul.f32 1.0, %v862
        %v864 = vrcp.pop %v813
        %v865 = vmul.f32 1.0, %v864
        %v866 = vrcp.pop %v814
        %v867 = vmul.f32 1.0, %v866
        %v868 = vrcp.pop %v815
        %v869 = vmul.f32 1.0, %v868
        %v870 = vrcp.pop %v816
        %v871 = vmul.f32 1.0, %v870
        %v872 = vrcp.pop %v817
        %v873 = vmul.f32 1.0, %v872
        %v874 = vrcp.pop %v818
        %v875 = vmul.f32 1.0, %v874
        %v876 = vrcp.pop %v819
        %v877 = vmul.f32 1.0, %v876
        %v878 = vrcp.pop %v820
        %v879 = vmul.f32 1.0, %v878
        %v880 = vrcp.pop %v821
        %v881 = vmul.f32 1.0, %v880
        %v882 = vrcp.pop %v822
        %v883 = vmul.f32 1.0, %v882
        %v884 = vrcp.pop %v823
        %v885 = vmul.f32 1.0, %v884
        %v886 = vrcp.pop %v824
        %v887 = vmul.f32 1.0, %v886
        %v888 = vrcp.pop %v825
        %v889 = vmul.f32 1.0, %v888
        %v890 = vmul.f32 %v540, %v827
        %v891 = vmul.f32 %v545, %v829
        %v892 = vmul.f32 %v550, %v831
        %v893 = vmul.f32 %v555, %v833
        %v894 = vmul.f32 %v560, %v835
        %v895 = vmul.f32 %v565, %v837
        %v896 = vmul.f32 %v570, %v839
        %v897 = vmul.f32 %v575, %v841
        %v898 = vmul.f32 %v580, %v843
        %v899 = vmul.f32 %v585, %v845
        %v900 = vmul.f32 %v590, %v847
        %v901 = vmul.f32 %v595, %v849
        %v902 = vmul.f32 %v600, %v851
        %v903 = vmul.f32 %v605, %v853
        %v904 = vmul.f32 %v610, %v855
        %v905 = vmul.f32 %v615, %v857
        %v906 = vmul.f32 %v620, %v859
        %v907 = vmul.f32 %v625, %v861
        %v908 = vmul.f32 %v630, %v863
        %v909 = vmul.f32 %v635, %v865
        %v910 = vmul.f32 %v640, %v867
        %v911 = vmul.f32 %v645, %v869
        %v912 = vmul.f32 %v650, %v871
        %v913 = vmul.f32 %v655, %v873
        %v914 = vmul.f32 %v660, %v875
        %v915 = vmul.f32 %v665, %v877
        %v916 = vmul.f32 %v670, %v879
        %v917 = vmul.f32 %v675, %v881
        %v918 = vmul.f32 %v680, %v883
        %v919 = vmul.f32 %v685, %v885
        %v920 = vmul.f32 %v690, %v887
        %v921 = vmul.f32 %v695, %v889
        %v922 = vld [vmem:[%s321] sm:$0xff]
        %v923 = vld [vmem:[%s321 + $0x8] sm:$0xff]
        %v924 = vld [vmem:[%s321 + $0x10] sm:$0xff]
        %v925 = vld [vmem:[%s321 + $0x18] sm:$0xff]
        %v926 = vld [vmem:[%s321 + $0x20] sm:$0xff]
        %v927 = vld [vmem:[%s321 + $0x28] sm:$0xff]
        %v928 = vld [vmem:[%s321 + $0x30] sm:$0xff]
        %v929 = vld [vmem:[%s321 + $0x38] sm:$0xff]
        %v930 = vld [vmem:[%s321 + $0x40] sm:$0xff]
        %v931 = vld [vmem:[%s321 + $0x48] sm:$0xff]
        %v932 = vld [vmem:[%s321 + $0x50] sm:$0xff]
        %v933 = vld [vmem:[%s321 + $0x58] sm:$0xff]
        %v934 = vld [vmem:[%s321 + $0x60] sm:$0xff]
        %v935 = vld [vmem:[%s321 + $0x68] sm:$0xff]
        %v936 = vld [vmem:[%s321 + $0x70] sm:$0xff]
        %v937 = vld [vmem:[%s321 + $0x78] sm:$0xff]
        %v938 = vld [vmem:[%s326] sm:$0x1]
        %v940 = vlaneseq
        %v941 = vshrl.u32 %v940, 7
        %v942 = vsub.s32 0, %v941
        %v943 = vrot.slane %v938, %v942
        %945 = vmatprep.subr.mxu0 0.0
        %946 = vmatpush1.msra.mxu0 %v922
        %947 = vmatprep.subr.mxu0 0.0
        %948 = vmatpush1.msra.mxu0 %v923
        %949 = vmatprep.subr.mxu0 0.0
        %950 = vmatpush1.msra.mxu0 %v924
        %951 = vmatprep.subr.mxu0 0.0
        %952 = vmatpush1.msra.mxu0 %v925
        %953 = vmatprep.subr.mxu0 0.0
        %954 = vmatpush1.msra.mxu0 %v926
        %955 = vmatprep.subr.mxu0 0.0
        %956 = vmatpush1.msra.mxu0 %v927
        %957 = vmatprep.subr.mxu0 0.0
        %958 = vmatpush1.msra.mxu0 %v928
        %959 = vmatprep.subr.mxu0 0.0
        %960 = vmatpush1.msra.mxu0 %v929
        %961 = vmatprep.subr.mxu0 0.0
        %962 = vmatpush1.msra.mxu0 %v930
        %963 = vmatprep.subr.mxu0 0.0
        %964 = vmatpush1.msra.mxu0 %v931
        %965 = vmatprep.subr.mxu0 0.0
        %966 = vmatpush1.msra.mxu0 %v932
        %967 = vmatprep.subr.mxu0 0.0
        %968 = vmatpush1.msra.mxu0 %v933
        %969 = vmatprep.subr.mxu0 0.0
        %970 = vmatpush1.msra.mxu0 %v934
        %971 = vmatprep.subr.mxu0 0.0
        %972 = vmatpush1.msra.mxu0 %v935
        %973 = vmatprep.subr.mxu0 0.0
        %974 = vmatpush1.msra.mxu0 %v936
        %975 = vmatprep.subr.mxu0 0.0
        %976 = vmatpush1.msra.mxu0 %v937
        %977 = vmatprep.subr.mxu0 0.0
        %978 = vmatpush1.msra.mxu0 0.0
        %979 = vmatprep.subr.mxu0 0.0
        %980 = vmatpush1.msra.mxu0 0.0
        %981 = vmatprep.subr.mxu0 0.0
        %982 = vmatpush1.msra.mxu0 0.0
        %983 = vmatprep.subr.mxu0 0.0
        %984 = vmatpush1.msra.mxu0 0.0
        %985 = vmatprep.subr.mxu0 0.0
        %986 = vmatpush1.msra.mxu0 0.0
        %987 = vmatprep.subr.mxu0 0.0
        %988 = vmatpush1.msra.mxu0 0.0
        %989 = vmatprep.subr.mxu0 0.0
        %990 = vmatpush1.msra.mxu0 0.0
        %991 = vmatprep.subr.mxu0 0.0
        %992 = vmatpush1.msra.mxu0 0.0
        %993 = vmatprep.subr.mxu0 0.0
        %994 = vmatpush1.msra.mxu0 0.0
        %995 = vmatprep.subr.mxu0 0.0
        %996 = vmatpush1.msra.mxu0 0.0
        %997 = vmatprep.subr.mxu0 0.0
        %998 = vmatpush1.msra.mxu0 0.0
        %999 = vmatprep.subr.mxu0 0.0
        %1000 = vmatpush1.msra.mxu0 0.0
        %1001 = vmatprep.subr.mxu0 0.0
        %1002 = vmatpush1.msra.mxu0 0.0
        %1003 = vmatprep.subr.mxu0 0.0
        %1004 = vmatpush1.msra.mxu0 0.0
        %1005 = vmatprep.subr.mxu0 0.0
        %1006 = vmatpush1.msra.mxu0 0.0
        %1007 = vmatprep.subr.mxu0 0.0
        %1008 = vmatpush1.msra.mxu0 0.0
        %1009 = vmatprep.mubr.f32.mxu0 0.0
        %1010 = vmatmul.mubr.f32.gmra.mrb[0].mxu0 %v890
        %v1011 = vpop.f32.mrb[0].mxu0
        %v1012 = vadd.f32 %v943, %v1011
        %v1013 = vpop.f32.mrb[0].mxu0
        %1014 = vmatprep.mubr.f32.mxu0 0.0
        %1015 = vmatmul.mubr.f32.gmra.mrb[0].mxu0 %v891
        %v1016 = vpop.f32.mrb[0].mxu0
        %v1017 = vadd.f32 %v943, %v1016
        %v1018 = vpop.f32.mrb[0].mxu0
        %1019 = vmatprep.mubr.f32.mxu0 0.0
        %1020 = vmatmul.mubr.f32.gmra.mrb[0].mxu0 %v892
        %v1021 = vpop.f32.mrb[0].mxu0
        %v1022 = vadd.f32 %v943, %v1021
        %v1023 = vpop.f32.mrb[0].mxu0
        %1024 = vmatprep.mubr.f32.mxu0 0.0
        %1025 = vmatmul.mubr.f32.gmra.mrb[0].mxu0 %v893
        %v1026 = vpop.f32.mrb[0].mxu0
        %v1027 = vadd.f32 %v943, %v1026
        %v1028 = vpop.f32.mrb[0].mxu0
        %1029 = vmatprep.mubr.f32.mxu0 0.0
        %1030 = vmatmul.mubr.f32.gmra.mrb[0].mxu0 %v894
        %v1031 = vpop.f32.mrb[0].mxu0
        %v1032 = vadd.f32 %v943, %v1031
        %v1033 = vpop.f32.mrb[0].mxu0
        %1034 = vmatprep.mubr.f32.mxu0 0.0
        %1035 = vmatmul.mubr.f32.gmra.mrb[0].mxu0 %v895
        %v1036 = vpop.f32.mrb[0].mxu0
        %v1037 = vadd.f32 %v943, %v1036
        %v1038 = vpop.f32.mrb[0].mxu0
        %1039 = vmatprep.mubr.f32.mxu0 0.0
        %1040 = vmatmul.mubr.f32.gmra.mrb[0].mxu0 %v896
        %v1041 = vpop.f32.mrb[0].mxu0
        %v1042 = vadd.f32 %v943, %v1041
        %v1043 = vpop.f32.mrb[0].mxu0
        %1044 = vmatprep.mubr.f32.mxu0 0.0
        %1045 = vmatmul.mubr.f32.gmra.mrb[0].mxu0 %v897
        %v1046 = vpop.f32.mrb[0].mxu0
        %v1047 = vadd.f32 %v943, %v1046
        %v1048 = vpop.f32.mrb[0].mxu0
        %1049 = vmatprep.mubr.f32.mxu0 0.0
        %1050 = vmatmul.mubr.f32.gmra.mrb[0].mxu0 %v898
        %v1051 = vpop.f32.mrb[0].mxu0
        %v1052 = vadd.f32 %v943, %v1051
        %v1053 = vpop.f32.mrb[0].mxu0
        %1054 = vmatprep.mubr.f32.mxu0 0.0
        %1055 = vmatmul.mubr.f32.gmra.mrb[0].mxu0 %v899
        %v1056 = vpop.f32.mrb[0].mxu0
        %v1057 = vadd.f32 %v943, %v1056
        %v1058 = vpop.f32.mrb[0].mxu0
        %1059 = vmatprep.mubr.f32.mxu0 0.0
        %1060 = vmatmul.mubr.f32.gmra.mrb[0].mxu0 %v900
        %v1061 = vpop.f32.mrb[0].mxu0
        %v1062 = vadd.f32 %v943, %v1061
        %v1063 = vpop.f32.mrb[0].mxu0
        %1064 = vmatprep.mubr.f32.mxu0 0.0
        %1065 = vmatmul.mubr.f32.gmra.mrb[0].mxu0 %v901
        %v1066 = vpop.f32.mrb[0].mxu0
        %v1067 = vadd.f32 %v943, %v1066
        %v1068 = vpop.f32.mrb[0].mxu0
        %1069 = vmatprep.mubr.f32.mxu0 0.0
        %1070 = vmatmul.mubr.f32.gmra.mrb[0].mxu0 %v902
        %v1071 = vpop.f32.mrb[0].mxu0
        %v1072 = vadd.f32 %v943, %v1071
        %v1073 = vpop.f32.mrb[0].mxu0
        %1074 = vmatprep.mubr.f32.mxu0 0.0
        %1075 = vmatmul.mubr.f32.gmra.mrb[0].mxu0 %v903
        %v1076 = vpop.f32.mrb[0].mxu0
        %v1077 = vadd.f32 %v943, %v1076
        %v1078 = vpop.f32.mrb[0].mxu0
        %1079 = vmatprep.mubr.f32.mxu0 0.0
        %1080 = vmatmul.mubr.f32.gmra.mrb[0].mxu0 %v904
        %v1081 = vpop.f32.mrb[0].mxu0
        %v1082 = vadd.f32 %v943, %v1081
        %v1083 = vpop.f32.mrb[0].mxu0
        %1084 = vmatprep.mubr.f32.mxu0 0.0
        %1085 = vmatmul.mubr.f32.gmra.mrb[0].mxu0 %v905
        %v1086 = vpop.f32.mrb[0].mxu0
        %v1087 = vadd.f32 %v943, %v1086
        %v1088 = vpop.f32.mrb[0].mxu0
        %1089 = vmatprep.mubr.f32.mxu0 0.0
        %1090 = vmatmul.mubr.f32.gmra.mrb[0].mxu0 %v906
        %v1091 = vpop.f32.mrb[0].mxu0
        %v1092 = vadd.f32 %v943, %v1091
        %v1093 = vpop.f32.mrb[0].mxu0
        %1094 = vmatprep.mubr.f32.mxu0 0.0
        %1095 = vmatmul.mubr.f32.gmra.mrb[0].mxu0 %v907
        %v1096 = vpop.f32.mrb[0].mxu0
        %v1097 = vadd.f32 %v943, %v1096
        %v1098 = vpop.f32.mrb[0].mxu0
        %1099 = vmatprep.mubr.f32.mxu0 0.0
        %1100 = vmatmul.mubr.f32.gmra.mrb[0].mxu0 %v908
        %v1101 = vpop.f32.mrb[0].mxu0
        %v1102 = vadd.f32 %v943, %v1101
        %v1103 = vpop.f32.mrb[0].mxu0
        %1104 = vmatprep.mubr.f32.mxu0 0.0
        %1105 = vmatmul.mubr.f32.gmra.mrb[0].mxu0 %v909
        %v1106 = vpop.f32.mrb[0].mxu0
        %v1107 = vadd.f32 %v943, %v1106
        %v1108 = vpop.f32.mrb[0].mxu0
        %1109 = vmatprep.mubr.f32.mxu0 0.0
        %1110 = vmatmul.mubr.f32.gmra.mrb[0].mxu0 %v910
        %v1111 = vpop.f32.mrb[0].mxu0
        %v1112 = vadd.f32 %v943, %v1111
        %v1113 = vpop.f32.mrb[0].mxu0
        %1114 = vmatprep.mubr.f32.mxu0 0.0
        %1115 = vmatmul.mubr.f32.gmra.mrb[0].mxu0 %v911
        %v1116 = vpop.f32.mrb[0].mxu0
        %v1117 = vadd.f32 %v943, %v1116
        %v1118 = vpop.f32.mrb[0].mxu0
        %1119 = vmatprep.mubr.f32.mxu0 0.0
        %1120 = vmatmul.mubr.f32.gmra.mrb[0].mxu0 %v912
        %v1121 = vpop.f32.mrb[0].mxu0
        %v1122 = vadd.f32 %v943, %v1121
        %v1123 = vpop.f32.mrb[0].mxu0
        %1124 = vmatprep.mubr.f32.mxu0 0.0
        %1125 = vmatmul.mubr.f32.gmra.mrb[0].mxu0 %v913
        %v1126 = vpop.f32.mrb[0].mxu0
        %v1127 = vadd.f32 %v943, %v1126
        %v1128 = vpop.f32.mrb[0].mxu0
        %1129 = vmatprep.mubr.f32.mxu0 0.0
        %1130 = vmatmul.mubr.f32.gmra.mrb[0].mxu0 %v914
        %v1131 = vpop.f32.mrb[0].mxu0
        %v1132 = vadd.f32 %v943, %v1131
        %v1133 = vpop.f32.mrb[0].mxu0
        %1134 = vmatprep.mubr.f32.mxu0 0.0
        %1135 = vmatmul.mubr.f32.gmra.mrb[0].mxu0 %v915
        %v1136 = vpop.f32.mrb[0].mxu0
        %v1137 = vadd.f32 %v943, %v1136
        %v1138 = vpop.f32.mrb[0].mxu0
        %1139 = vmatprep.mubr.f32.mxu0 0.0
        %1140 = vmatmul.mubr.f32.gmra.mrb[0].mxu0 %v916
        %v1141 = vpop.f32.mrb[0].mxu0
        %v1142 = vadd.f32 %v943, %v1141
        %v1143 = vpop.f32.mrb[0].mxu0
        %1144 = vmatprep.mubr.f32.mxu0 0.0
        %1145 = vmatmul.mubr.f32.gmra.mrb[0].mxu0 %v917
        %v1146 = vpop.f32.mrb[0].mxu0
        %v1147 = vadd.f32 %v943, %v1146
        %v1148 = vpop.f32.mrb[0].mxu0
        %1149 = vmatprep.mubr.f32.mxu0 0.0
        %1150 = vmatmul.mubr.f32.gmra.mrb[0].mxu0 %v918
        %v1151 = vpop.f32.mrb[0].mxu0
        %v1152 = vadd.f32 %v943, %v1151
        %v1153 = vpop.f32.mrb[0].mxu0
        %1154 = vmatprep.mubr.f32.mxu0 0.0
        %1155 = vmatmul.mubr.f32.gmra.mrb[0].mxu0 %v919
        %v1156 = vpop.f32.mrb[0].mxu0
        %v1157 = vadd.f32 %v943, %v1156
        %v1158 = vpop.f32.mrb[0].mxu0
        %1159 = vmatprep.mubr.f32.mxu0 0.0
        %1160 = vmatmul.mubr.f32.gmra.mrb[0].mxu0 %v920
        %v1161 = vpop.f32.mrb[0].mxu0
        %v1162 = vadd.f32 %v943, %v1161
        %v1163 = vpop.f32.mrb[0].mxu0
        %1164 = vmatprep.mubr.f32.mxu0 0.0
        %1165 = vmatmul.mubr.f32.gmra.mrb[0].mxu0 %v921
        %v1166 = vpop.f32.mrb[0].mxu0
        %v1167 = vadd.f32 %v943, %v1166
        %v1168 = vpop.f32.mrb[0].mxu0
        %1169 = vdwg.mxu0
        %1170 = vst [vmem:[%s297] sm:$0xff] %v1012
        %1171 = vst [vmem:[%s297 + $0x8] sm:$0xff] %v1017
        %1172 = vst [vmem:[%s297 + $0x10] sm:$0xff] %v1022
        %1173 = vst [vmem:[%s297 + $0x18] sm:$0xff] %v1027
        %1174 = vst [vmem:[%s297 + $0x20] sm:$0xff] %v1032
        %1175 = vst [vmem:[%s297 + $0x28] sm:$0xff] %v1037
        %1176 = vst [vmem:[%s297 + $0x30] sm:$0xff] %v1042
        %1177 = vst [vmem:[%s297 + $0x38] sm:$0xff] %v1047
        %1178 = vst [vmem:[%s297 + $0x40] sm:$0xff] %v1052
        %1179 = vst [vmem:[%s297 + $0x48] sm:$0xff] %v1057
        %1180 = vst [vmem:[%s297 + $0x50] sm:$0xff] %v1062
        %1181 = vst [vmem:[%s297 + $0x58] sm:$0xff] %v1067
        %1182 = vst [vmem:[%s297 + $0x60] sm:$0xff] %v1072
        %1183 = vst [vmem:[%s297 + $0x68] sm:$0xff] %v1077
        %1184 = vst [vmem:[%s297 + $0x70] sm:$0xff] %v1082
        %1185 = vst [vmem:[%s297 + $0x78] sm:$0xff] %v1087
        %1186 = vst [vmem:[%s297 + $0x80] sm:$0xff] %v1092
        %1187 = vst [vmem:[%s297 + $0x88] sm:$0xff] %v1097
        %1188 = vst [vmem:[%s297 + $0x90] sm:$0xff] %v1102
        %1189 = vst [vmem:[%s297 + $0x98] sm:$0xff] %v1107
        %1190 = vst [vmem:[%s297 + $0xa0] sm:$0xff] %v1112
        %1191 = vst [vmem:[%s297 + $0xa8] sm:$0xff] %v1117
        %1192 = vst [vmem:[%s297 + $0xb0] sm:$0xff] %v1122
        %1193 = vst [vmem:[%s297 + $0xb8] sm:$0xff] %v1127
        %1194 = vst [vmem:[%s297 + $0xc0] sm:$0xff] %v1132
        %1195 = vst [vmem:[%s297 + $0xc8] sm:$0xff] %v1137
        %1196 = vst [vmem:[%s297 + $0xd0] sm:$0xff] %v1142
        %1197 = vst [vmem:[%s297 + $0xd8] sm:$0xff] %v1147
        %1198 = vst [vmem:[%s297 + $0xe0] sm:$0xff] %v1152
        %1199 = vst [vmem:[%s297 + $0xe8] sm:$0xff] %v1157
        %1200 = vst [vmem:[%s297 + $0xf0] sm:$0xff] %v1162
        %1201 = vst [vmem:[%s297 + $0xf8] sm:$0xff] %v1167
        %s1202 = sand.u32 %s172, 1
        %s1203 = scalar_lea.sflag [#allocation5], %s1202
        %s1204 = sand.u32 %s172, 1
        %s1205 = smul.addr %s1204, 256
        %s1206 = scalar_lea.vmem [#allocation4], %s1205
        // Predicated region
        $region41: #{tpu_custom_call.1} parent=39 // pred_check
          %p1207 = pneg %p182
        $region42: #{tpu_custom_call.1} parent=39 // pred_check_branch
          %1209 = sbr.rel (%p1207) target = $region44
        $region43: #{tpu_custom_call.1} parent=39 // pred_region
          %s1210 = smul.u32 32, %s26
          %s1212 = ssub.s32 4096, 4096
          %1213 = vsyncadd %s1203, %s1212
          %s1214 = smul.addr %s1210, 128
          %s1215 = scalar_lea.hbm %s6, %s1214
          %s1216 = sshll.u32 %s1206, 4
          %s1217 = int_to_ptr.vmem [resolvable:$true] %s1216
          %1222 = dma.vmem_to_hbm [thread:$0]  %s1217, 4096, %s1215, %s1203, 128, 128, 8
        $region44: #{tpu_custom_call.1} parent=39 // pred_fallthru
          _
      $region40: #{tpu_custom_call.1} parent=5 // pred_fallthru
        _
      %p1223 = scmp.le.s32.totalorder 2, %s21
      // Predicated region
      $region45: #{tpu_custom_call.1} parent=5 // pred_check
        %p1224 = pneg %p1223
      $region46: #{tpu_custom_call.1} parent=5 // pred_check_branch
        %1226 = sbr.rel (%p1224) target = $region48
      $region47: #{tpu_custom_call.1} parent=5 // pred_region
        %s1227 = ssub.s32 %s21, 2
        // Predicated region
        $region49: #{tpu_custom_call.1} parent=47 // pred_check
          %p1228 = pneg %p188
        $region50: #{tpu_custom_call.1} parent=47 // pred_check_branch
          %1230 = sbr.rel (%p1228) target = $region52
        $region51: #{tpu_custom_call.1} parent=47 // pred_region
          %s1231 = sand.u32 %s173, 1
          %s1232 = scalar_lea.sflag [#allocation5], %s1231
          %s1233 = sand.u32 %s173, 1
          %s1234 = smul.addr %s1233, 256
          %s1235 = scalar_lea.vmem [#allocation4], %s1234
          %1236 = dma.done %s1232, 4096
        $region52: #{tpu_custom_call.1} parent=47 // pred_fallthru
          _
      $region48: #{tpu_custom_call.1} parent=5 // pred_fallthru
        _
    $region6: #{tpu_custom_call.1} parent=1 // loop_footer
      %s25 = sadd.s32 1, %s21
    $region7: #{tpu_custom_call.1} parent=1 // loop_footer_branch
      %20 = sbr.rel target = $region3
    $region8: #{tpu_custom_call.1} parent=1 // loop_exit
      _
    %1237 = vsyncpa [#allocation5], 1
    %s1238 = scalar_lea.sflag [#allocation5], 1
    %1239 = vsyncpa %s1238, 1

// kernel: tpu_custom_call.1
$region0: #{tpu_custom_call.1}
  #allocation0 [shape = 'u32[]', space=smem, size = 0x4, offset = 0x4, fixed_abs, tag = 'smem constant byte address 0x4 - core index']
  #allocation1 [shape = 'u32[144,128]{1,0:T(1,128)}', space=vmem, size = 0x12000, scoped, tag = 'internal scratch']
  #allocation2 [shape = 's32[1]{0}', space=sflag, size = 0x4, scoped, tag = 'scoped memory for tpu_custom_call.1']
  #allocation3 [shape = 'u8[512]{0}', space=smem, size = 0x200, scoped, tag = 'prefetched SMEM operand 0']
  %s0 = inlined_call_operand.vmem [shape: s32[5], index: 0, kind: input, shape index: {}]
  %s1 = inlined_call_operand.vmem [shape: f32[1280,64], index: 1, kind: input, shape index: {}]
  %s2 = inlined_call_operand.vmem [shape: f32[3,64,128], index: 2, kind: input, shape index: {}]
  %s3 = inlined_call_operand.vmem [shape: f32[3,1,128], index: 3, kind: input, shape index: {}]
  %s4 = inlined_call_operand.vmem [shape: f32[3,128,128], index: 4, kind: input, shape index: {}]
  %s5 = inlined_call_operand.vmem [shape: f32[3,1,128], index: 5, kind: input, shape index: {}]
  %s6 = inlined_call_operand.hbm [shape: f32[1280,128], index: 6, kind: output, shape index: {}]
  %s7 = sld [smem:[#allocation0]]
  $region53: #{tpu_custom_call.1} parent=0
    _
  %s9 = ssub.s32 1, %s7
  %s10 = scalar_select 0, %s9, %s7
  %s11 = sshll.u32 %s0, 4
  %s12 = int_to_ptr.vmem [resolvable:$true] %s11
  %14 = dma.vmem_to_smem %s12, 16, [#allocation3], [#allocation2]
  %15 = dma.done [#allocation2], 16
  %16 = sfence
  $region1: #{tpu_custom_call.1} parent=0
    #allocation4 [shape = 'u8[262144]{0}', space=vmem, size = 0x40000, scoped, tag = 'output window, operand 0']
    #allocation5 [shape = 's32[2]{0}', space=sflag, size = 0x8, scoped, tag = 'scoped memory for tpu_custom_call.1']
    %17 = vsyncpa [#allocation5], 0
    %s18 = scalar_lea.sflag [#allocation5], 1
    %19 = vsyncpa %s18, 0
    loop: start=0, step=1, limit=7
    $region2: #{tpu_custom_call.1} parent=1 // loop_pre_header
      _
    $region3: #{tpu_custom_call.1} parent=1 // loop_header
      %s21 = sphi 0, %s25
      %p22 = scmp.ge.s32.totalorder %s21, 7
      %s31 = sphi 0, %s33
      %s34 = sphi 0, %s31
      %s35 = sphi 0, %s34
      %s51 = sphi 0, %s35
      %s59 = sphi 0, %s61
      %s62 = sphi 0, %s59
      %s63 = sphi 0, %s62
      %s79 = sphi 0, %s63
      %s87 = sphi 0, %s89
      %s90 = sphi 0, %s87
      %s91 = sphi 0, %s90
      %s107 = sphi 0, %s91
      %s115 = sphi 0, %s117
      %s118 = sphi 0, %s115
      %s119 = sphi 0, %s118
      %s135 = sphi 0, %s119
      %s143 = sphi 0, %s145
      %s146 = sphi 0, %s143
      %s147 = sphi 0, %s146
      %s163 = sphi 0, %s147
      %s169 = sphi 0, %s171
      %s172 = sphi 0, %s169
      %s173 = sphi 0, %s172
      %s189 = sphi 0, %s173
    $region4: #{tpu_custom_call.1} parent=1 // loop_header_branch
      %24 = sbr.rel (%p22) target = $region8
    $region5: #{tpu_custom_call.1} parent=1 // loop_body
      %s26 = ssub.s32 %s21, 1
      %s27 = ssub.s32 %s21, 2
      %s28 = sadd.s32 %s21, 1
      %s29 = ssub.s32 %s21, %s28
      %p30 = scmp.eq.s32.totalorder %s29, 0
      %s32 = sadd.s32 %s31, 1
      %s33 = scalar_select %p30, %s31, %s32
      %p36 = pneg %p30
      %p37 = scmp.eq.s32.totalorder %s21, 4
      %p38 = por %p36, %p37
      %p39 = scmp.ne.s32.totalorder %s31, %s34
      %p40 = scmp.eq.s32.totalorder %s21, 0
      %p41 = por %p39, %p40
      %p42 = scmp.ne.s32.totalorder %s31, %s34
      %p43 = scmp.eq.s32.totalorder %s26, 4
      %p44 = por %p42, %p43
      %p45 = scmp.ne.s32.totalorder %s34, %s35
      %p46 = scmp.eq.s32.totalorder %s26, 0
      %p47 = por %p45, %p46
      %p48 = scmp.ne.s32.totalorder %s34, %s35
      %p49 = scmp.eq.s32.totalorder %s27, 4
      %p50 = por %p48, %p49
      %p52 = scmp.ne.s32.totalorder %s35, %s51
      %p53 = scmp.eq.s32.totalorder %s27, 0
      %p54 = por %p52, %p53
      %s55 = sld [smem:[#allocation3 + %s21]]
      %s56 = sld [smem:[#allocation3 + %s28]]
      %s57 = ssub.s32 %s55, %s56
      %p58 = scmp.eq.s32.totalorder %s57, 0
      %s60 = sadd.s32 %s59, 1
      %s61 = scalar_select %p58, %s59, %s60
      %p64 = pneg %p58
      %p65 = scmp.eq.s32.totalorder %s21, 4
      %p66 = por %p64, %p65
      %p67 = scmp.ne.s32.totalorder %s59, %s62
      %p68 = scmp.eq.s32.totalorder %s21, 0
      %p69 = por %p67, %p68
      %p70 = scmp.ne.s32.totalorder %s59, %s62
      %p71 = scmp.eq.s32.totalorder %s26, 4
      %p72 = por %p70, %p71
      %p73 = scmp.ne.s32.totalorder %s62, %s63
      %p74 = scmp.eq.s32.totalorder %s26, 0
      %p75 = por %p73, %p74
      %p76 = scmp.ne.s32.totalorder %s62, %s63
      %p77 = scmp.eq.s32.totalorder %s27, 4
      %p78 = por %p76, %p77
      %p80 = scmp.ne.s32.totalorder %s63, %s79
      %p81 = scmp.eq.s32.totalorder %s27, 0
      %p82 = por %p80, %p81
      %s83 = sld [smem:[#allocation3 + %s21]]
      %s84 = sld [smem:[#allocation3 + %s28]]
      %s85 = ssub.s32 %s83, %s84
      %p86 = scmp.eq.s32.totalorder %s85, 0
      %s88 = sadd.s32 %s87, 1
      %s89 = scalar_select %p86, %s87, %s88
      %p92 = pneg %p86
      %p93 = scmp.eq.s32.totalorder %s21, 4
      %p94 = por %p92, %p93
      %p95 = scmp.ne.s32.totalorder %s87, %s90
      %p96 = scmp.eq.s32.totalorder %s21, 0
      %p97 = por %p95, %p96
      %p98 = scmp.ne.s32.totalorder %s87, %s90
      %p99 = scmp.eq.s32.totalorder %s26, 4
      %p100 = por %p98, %p99
      %p101 = scmp.ne.s32.totalorder %s90, %s91
      %p102 = scmp.eq.s32.totalorder %s26, 0
      %p103 = por %p101, %p102
      %p104 = scmp.ne.s32.totalorder %s90, %s91
      %p105 = scmp.eq.s32.totalorder %s27, 4
      %p106 = por %p104, %p105
      %p108 = scmp.ne.s32.totalorder %s91, %s107
      %p109 = scmp.eq.s32.totalorder %s27, 0
      %p110 = por %p108, %p109
      %s111 = sld [smem:[#allocation3 + %s21]]
      %s112 = sld [smem:[#allocation3 + %s28]]
      %s113 = ssub.s32 %s111, %s112
      %p114 = scmp.eq.s32.totalorder %s113, 0
      %s116 = sadd.s32 %s115, 1
      %s117 = scalar_select %p114, %s115, %s116
      %p120 = pneg %p114
      %p121 = scmp.eq.s32.totalorder %s21, 4
      %p122 = por %p120, %p121
      %p123 = scmp.ne.s32.totalorder %s115, %s118
      %p124 = scmp.eq.s32.totalorder %s21, 0
      %p125 = por %p123, %p124
      %p126 = scmp.ne.s32.totalorder %s115, %s118
      %p127 = scmp.eq.s32.totalorder %s26, 4
      %p128 = por %p126, %p127
      %p129 = scmp.ne.s32.totalorder %s118, %s119
      %p130 = scmp.eq.s32.totalorder %s26, 0
      %p131 = por %p129, %p130
      %p132 = scmp.ne.s32.totalorder %s118, %s119
      %p133 = scmp.eq.s32.totalorder %s27, 4
      %p134 = por %p132, %p133
      %p136 = scmp.ne.s32.totalorder %s119, %s135
      %p137 = scmp.eq.s32.totalorder %s27, 0
      %p138 = por %p136, %p137
      %s139 = sld [smem:[#allocation3 + %s21]]
      %s140 = sld [smem:[#allocation3 + %s28]]
      %s141 = ssub.s32 %s139, %s140
      %p142 = scmp.eq.s32.totalorder %s141, 0
      %s144 = sadd.s32 %s143, 1
      %s145 = scalar_select %p142, %s143, %s144
      %p148 = pneg %p142
      %p149 = scmp.eq.s32.totalorder %s21, 4
      %p150 = por %p148, %p149
      %p151 = scmp.ne.s32.totalorder %s143, %s146
      %p152 = scmp.eq.s32.totalorder %s21, 0
      %p153 = por %p151, %p152
      %p154 = scmp.ne.s32.totalorder %s143, %s146
      %p155 = scmp.eq.s32.totalorder %s26, 4
      %p156 = por %p154, %p155
      %p157 = scmp.ne.s32.totalorder %s146, %s147
      %p158 = scmp.eq.s32.totalorder %s26, 0
      %p159 = por %p157, %p158
      %p160 = scmp.ne.s32.totalorder %s146, %s147
      %p161 = scmp.eq.s32.totalorder %s27, 4
      %p162 = por %p160, %p161
      %p164 = scmp.ne.s32.totalorder %s147, %s163
      %p165 = scmp.eq.s32.totalorder %s27, 0
      %p166 = por %p164, %p165
      %s167 = ssub.s32 %s21, %s28
      %p168 = scmp.eq.s32.totalorder %s167, 0
      %s170 = sadd.s32 %s169, 1
      %s171 = scalar_select %p168, %s169, %s170
      %p174 = pneg %p168
      %p175 = scmp.eq.s32.totalorder %s21, 4
      %p176 = por %p174, %p175
      %p177 = scmp.ne.s32.totalorder %s169, %s172
      %p178 = scmp.eq.s32.totalorder %s21, 0
      %p179 = por %p177, %p178
      %p180 = scmp.ne.s32.totalorder %s169, %s172
      %p181 = scmp.eq.s32.totalorder %s26, 4
      %p182 = por %p180, %p181
      %p183 = scmp.ne.s32.totalorder %s172, %s173
      %p184 = scmp.eq.s32.totalorder %s26, 0
      %p185 = por %p183, %p184
      %p186 = scmp.ne.s32.totalorder %s172, %s173
      %p187 = scmp.eq.s32.totalorder %s27, 4
      %p188 = por %p186, %p187
      %p190 = scmp.ne.s32.totalorder %s173, %s189
      %p191 = scmp.eq.s32.totalorder %s27, 0
      %p192 = por %p190, %p191
      %p193 = scmp.le.s32.totalorder 1, %s21
      %p194 = scmp.lt.s32.totalorder %s21, 6
      %p195 = pnand %p193, %p194
      %p196 = pneg %p195
      // Predicated region
      $region9: #{tpu_custom_call.1} parent=5 // pred_check
        _
      $region10: #{tpu_custom_call.1} parent=5 // pred_check_branch
        %198 = sbr.rel (%p195) target = $region12
      $region11: #{tpu_custom_call.1} parent=5 // pred_region
        %s199 = ssub.s32 %s21, 1
      $region12: #{tpu_custom_call.1} parent=5 // pred_fallthru
        _
      %p200 = scmp.lt.s32.totalorder %s21, 5
      // Predicated region
      $region13: #{tpu_custom_call.1} parent=5 // pred_check
        %p201 = pneg %p200
      $region14: #{tpu_custom_call.1} parent=5 // pred_check_branch
        %203 = sbr.rel (%p201) target = $region16
      $region15: #{tpu_custom_call.1} parent=5 // pred_region
        // Predicated region
        $region17: #{tpu_custom_call.1} parent=15 // pred_check
          %p204 = pneg %p41
        $region18: #{tpu_custom_call.1} parent=15 // pred_check_branch
          %206 = sbr.rel (%p204) target = $region20
        $region19: #{tpu_custom_call.1} parent=15 // pred_region
          %s207 = smul.u32 32, %s21
          %p208 = scmp.lt.s32.totalorder %s207, 159
          %s209 = scalar_select %p208, %s207, 159
          %s210 = smul.addr %s209, 8
          %s211 = scalar_lea.vmem %s1, %s210
          %s212 = smul.u32 32, %s21
        $region20: #{tpu_custom_call.1} parent=15 // pred_fallthru
          _
        // Predicated region
        $region21: #{tpu_custom_call.1} parent=15 // pred_check
          %p213 = pneg %p69
        $region22: #{tpu_custom_call.1} parent=15 // pred_check_branch
          %215 = sbr.rel (%p213) target = $region24
        $region23: #{tpu_custom_call.1} parent=15 // pred_region
          %s216 = sld [smem:[#allocation3 + %s21]]
          %p217 = scmp.lt.s32.totalorder %s216, 2
          %s218 = scalar_select %p217, %s216, 2
          %s219 = smul.addr %s218, 8
          %s220 = smul.addr %s219, 8
          %s221 = scalar_lea.vmem %s2, %s220
          %s222 = sld [smem:[#allocation3 + %s21]]
        $region24: #{tpu_custom_call.1} parent=15 // pred_fallthru
          _
        // Predicated region
        $region25: #{tpu_custom_call.1} parent=15 // pred_check
          %p223 = pneg %p97
        $region26: #{tpu_custom_call.1} parent=15 // pred_check_branch
          %225 = sbr.rel (%p223) target = $region28
        $region27: #{tpu_custom_call.1} parent=15 // pred_region
          %s226 = sld [smem:[#allocation3 + %s21]]
          %p227 = scmp.lt.s32.totalorder %s226, 2
          %s228 = scalar_select %p227, %s226, 2
          %s229 = scalar_lea.vmem %s3, %s228
          %s230 = sld [smem:[#allocation3 + %s21]]
        $region28: #{tpu_custom_call.1} parent=15 // pred_fallthru
          _
        // Predicated region
        $region29: #{tpu_custom_call.1} parent=15 // pred_check
          %p231 = pneg %p125
        $region30: #{tpu_custom_call.1} parent=15 // pred_check_branch
          %233 = sbr.rel (%p231) target = $region32
        $region31: #{tpu_custom_call.1} parent=15 // pred_region
          %s234 = sld [smem:[#allocation3 + %s21]]
          %p235 = scmp.lt.s32.totalorder %s234, 2
          %s236 = scalar_select %p235, %s234, 2
          %s237 = smul.addr %s236, 16
          %s238 = smul.addr %s237, 8
          %s239 = scalar_lea.vmem %s4, %s238
          %s240 = sld [smem:[#allocation3 + %s21]]
        $region32: #{tpu_custom_call.1} parent=15 // pred_fallthru
          _
        // Predicated region
        $region33: #{tpu_custom_call.1} parent=15 // pred_check
          %p241 = pneg %p153
        $region34: #{tpu_custom_call.1} parent=15 // pred_check_branch
          %243 = sbr.rel (%p241) target = $region36
        $region35: #{tpu_custom_call.1} parent=15 // pred_region
          %s244 = sld [smem:[#allocation3 + %s21]]
          %p245 = scmp.lt.s32.totalorder %s244, 2
          %s246 = scalar_select %p245, %s244, 2
          %s247 = scalar_lea.vmem %s5, %s246
          %s248 = sld [smem:[#allocation3 + %s21]]
        $region36: #{tpu_custom_call.1} parent=15 // pred_fallthru
          _
      $region16: #{tpu_custom_call.1} parent=5 // pred_fallthru
        _
      %p249 = scmp.le.s32.totalorder 1, %s21
      %p250 = scmp.lt.s32.totalorder %s21, 6
      %p251 = pnand %p249, %p250
      %p252 = pneg %p251
      // Predicated region
      $region37: #{tpu_custom_call.1} parent=5 // pred_check
        _
      $region38: #{tpu_custom_call.1} parent=5 // pred_check_branch
        %254 = sbr.rel (%p251) target = $region40
      $region39: #{tpu_custom_call.1} parent=5 // pred_region
        %s255 = ssub.s32 %s21, 1
        %s256 = smul.u32 32, %s26
        %p257 = scmp.lt.s32.totalorder %s256, 159
        %s258 = scalar_select %p257, %s256, 159
        %s259 = smul.addr %s258, 8
        %s260 = scalar_lea.vmem %s1, %s259
        %p261 = pneg %p47
        %p262 = pneg %p44
        %s263 = sld [smem:[#allocation3 + %s26]]
        %p264 = scmp.lt.s32.totalorder %s263, 2
        %s265 = scalar_select %p264, %s263, 2
        %s266 = smul.addr %s265, 8
        %s267 = smul.addr %s266, 8
        %s268 = scalar_lea.vmem %s2, %s267
        %p269 = pneg %p75
        %p270 = pneg %p72
        %s271 = sld [smem:[#allocation3 + %s26]]
        %p272 = scmp.lt.s32.totalorder %s271, 2
        %s273 = scalar_select %p272, %s271, 2
        %s274 = scalar_lea.vmem %s3, %s273
        %p275 = pneg %p103
        %p276 = pneg %p100
        %s277 = sld [smem:[#allocation3 + %s26]]
        %p278 = scmp.lt.s32.totalorder %s277, 2
        %s279 = scalar_select %p278, %s277, 2
        %s280 = smul.addr %s279, 16
        %s281 = smul.addr %s280, 8
        %s282 = scalar_lea.vmem %s4, %s281
        %p283 = pneg %p131
        %p284 = pneg %p128
        %s285 = sld [smem:[#allocation3 + %s26]]
        %p286 = scmp.lt.s32.totalorder %s285, 2
        %s287 = scalar_select %p286, %s285, 2
        %s288 = scalar_lea.vmem %s5, %s287
        %p289 = pneg %p159
        %p290 = pneg %p156
        %p291 = pneg %p185
        %p292 = pneg %p182
        %s293 = sand.u32 %s172, 1
        %s294 = scalar_lea.sflag [#allocation5], %s293
        %s295 = sand.u32 %s172, 1
        %s296 = smul.addr %s295, 256
        %s297 = scalar_lea.vmem [#allocation4], %s296
        %s298 = smul.u32 32, %s26
        %p299 = scmp.lt.s32.totalorder %s298, 159
        %s300 = scalar_select %p299, %s298, 159
        %s301 = smul.addr %s300, 8
        %s302 = scalar_lea.vmem %s1, %s301
        %s303 = smul.u32 32, %s26
        %s304 = sld [smem:[#allocation3 + %s26]]
        %p305 = scmp.lt.s32.totalorder %s304, 2
        %s306 = scalar_select %p305, %s304, 2
        %s307 = smul.addr %s306, 8
        %s308 = smul.addr %s307, 8
        %s309 = scalar_lea.vmem %s2, %s308
        %s310 = sld [smem:[#allocation3 + %s26]]
        %s311 = sld [smem:[#allocation3 + %s26]]
        %p312 = scmp.lt.s32.totalorder %s311, 2
        %s313 = scalar_select %p312, %s311, 2
        %s314 = scalar_lea.vmem %s3, %s313
        %s315 = sld [smem:[#allocation3 + %s26]]
        %s316 = sld [smem:[#allocation3 + %s26]]
        %p317 = scmp.lt.s32.totalorder %s316, 2
        %s318 = scalar_select %p317, %s316, 2
        %s319 = smul.addr %s318, 16
        %s320 = smul.addr %s319, 8
        %s321 = scalar_lea.vmem %s4, %s320
        %s322 = sld [smem:[#allocation3 + %s26]]
        %s323 = sld [smem:[#allocation3 + %s26]]
        %p324 = scmp.lt.s32.totalorder %s323, 2
        %s325 = scalar_select %p324, %s323, 2
        %s326 = scalar_lea.vmem %s5, %s325
        %s327 = sld [smem:[#allocation3 + %s26]]
        %s328 = smul.u32 32, %s26
        %v329 = vld [vmem:[%s302] sm:$0xff]
        %v330 = vld [vmem:[%s302 + $0x8] sm:$0xff]
        %v331 = vld [vmem:[%s302 + $0x10] sm:$0xff]
        %v332 = vld [vmem:[%s302 + $0x18] sm:$0xff]
        %v333 = vld [vmem:[%s302 + $0x20] sm:$0xff]
        %v334 = vld [vmem:[%s302 + $0x28] sm:$0xff]
        %v335 = vld [vmem:[%s302 + $0x30] sm:$0xff]
        %v336 = vld [vmem:[%s302 + $0x38] sm:$0xff]
        %v337 = vld [vmem:[%s302 + $0x40] sm:$0xff]
        %v338 = vld [vmem:[%s302 + $0x48] sm:$0xff]
        %v339 = vld [vmem:[%s302 + $0x50] sm:$0xff]
        %v340 = vld [vmem:[%s302 + $0x58] sm:$0xff]
        %v341 = vld [vmem:[%s302 + $0x60] sm:$0xff]
        %v342 = vld [vmem:[%s302 + $0x68] sm:$0xff]
        %v343 = vld [vmem:[%s302 + $0x70] sm:$0xff]
        %v344 = vld [vmem:[%s302 + $0x78] sm:$0xff]
        %v345 = vld [vmem:[%s302 + $0x80] sm:$0xff]
        %v346 = vld [vmem:[%s302 + $0x88] sm:$0xff]
        %v347 = vld [vmem:[%s302 + $0x90] sm:$0xff]
        %v348 = vld [vmem:[%s302 + $0x98] sm:$0xff]
        %v349 = vld [vmem:[%s302 + $0xa0] sm:$0xff]
        %v350 = vld [vmem:[%s302 + $0xa8] sm:$0xff]
        %v351 = vld [vmem:[%s302 + $0xb0] sm:$0xff]
        %v352 = vld [vmem:[%s302 + $0xb8] sm:$0xff]
        %v353 = vld [vmem:[%s302 + $0xc0] sm:$0xff]
        %v354 = vld [vmem:[%s302 + $0xc8] sm:$0xff]
        %v355 = vld [vmem:[%s302 + $0xd0] sm:$0xff]
        %v356 = vld [vmem:[%s302 + $0xd8] sm:$0xff]
        %v357 = vld [vmem:[%s302 + $0xe0] sm:$0xff]
        %v358 = vld [vmem:[%s302 + $0xe8] sm:$0xff]
        %v359 = vld [vmem:[%s302 + $0xf0] sm:$0xff]
        %v360 = vld [vmem:[%s302 + $0xf8] sm:$0xff]
        %v361 = vld [vmem:[%s309] sm:$0xff]
        %v362 = vld [vmem:[%s309 + $0x8] sm:$0xff]
        %v363 = vld [vmem:[%s309 + $0x10] sm:$0xff]
        %v364 = vld [vmem:[%s309 + $0x18] sm:$0xff]
        %v365 = vld [vmem:[%s309 + $0x20] sm:$0xff]
        %v366 = vld [vmem:[%s309 + $0x28] sm:$0xff]
        %v367 = vld [vmem:[%s309 + $0x30] sm:$0xff]
        %v368 = vld [vmem:[%s309 + $0x38] sm:$0xff]
        %v369 = vld [vmem:[%s314] sm:$0x1]
        %v371 = vlaneseq
        %v372 = vshrl.u32 %v371, 7
        %v373 = vsub.s32 0, %v372
        %v374 = vrot.slane %v369, %v373
        %vm376 = vcmask 523264
        %v378 = vsel %vm376, %v329, 0
        %v381 = vsel %vm376, %v330, 0
        %v384 = vsel %vm376, %v331, 0
        %v387 = vsel %vm376, %v332, 0
        %v390 = vsel %vm376, %v333, 0
        %v393 = vsel %vm376, %v334, 0
        %v396 = vsel %vm376, %v335, 0
        %v399 = vsel %vm376, %v336, 0
        %v402 = vsel %vm376, %v337, 0
        %v405 = vsel %vm376, %v338, 0
        %v408 = vsel %vm376, %v339, 0
        %v411 = vsel %vm376, %v340, 0
        %v414 = vsel %vm376, %v341, 0
        %v417 = vsel %vm376, %v342, 0
        %v420 = vsel %vm376, %v343, 0
        %v423 = vsel %vm376, %v344, 0
        %v426 = vsel %vm376, %v345, 0
        %v429 = vsel %vm376, %v346, 0
        %v432 = vsel %vm376, %v347, 0
        %v435 = vsel %vm376, %v348, 0
        %v438 = vsel %vm376, %v349, 0
        %v441 = vsel %vm376, %v350, 0
        %v444 = vsel %vm376, %v351, 0
        %v447 = vsel %vm376, %v352, 0
        %v450 = vsel %vm376, %v353, 0
        %v453 = vsel %vm376, %v354, 0
        %v456 = vsel %vm376, %v355, 0
        %v459 = vsel %vm376, %v356, 0
        %v462 = vsel %vm376, %v357, 0
        %v465 = vsel %vm376, %v358, 0
        %v468 = vsel %vm376, %v359, 0
        %v471 = vsel %vm376, %v360, 0
        %473 = vmatprep.subr.mxu0 0.0
        %474 = vmatpush1.msra.mxu0 %v361
        %475 = vmatprep.subr.mxu0 0.0
        %476 = vmatpush1.msra.mxu0 %v362
        %477 = vmatprep.subr.mxu0 0.0
        %478 = vmatpush1.msra.mxu0 %v363
        %479 = vmatprep.subr.mxu0 0.0
        %480 = vmatpush1.msra.mxu0 %v364
        %481 = vmatprep.subr.mxu0 0.0
        %482 = vmatpush1.msra.mxu0 %v365
        %483 = vmatprep.subr.mxu0 0.0
        %484 = vmatpush1.msra.mxu0 %v366
        %485 = vmatprep.subr.mxu0 0.0
        %486 = vmatpush1.msra.mxu0 %v367
        %487 = vmatprep.subr.mxu0 0.0
        %488 = vmatpush1.msra.mxu0 %v368
        %489 = vmatprep.subr.mxu0 0.0
        %490 = vmatpush1.msra.mxu0 0.0
        %491 = vmatprep.subr.mxu0 0.0
        %492 = vmatpush1.msra.mxu0 0.0
        %493 = vmatprep.subr.mxu0 0.0
        %494 = vmatpush1.msra.mxu0 0.0
        %495 = vmatprep.subr.mxu0 0.0
        %496 = vmatpush1.msra.mxu0 0.0
        %497 = vmatprep.subr.mxu0 0.0
        %498 = vmatpush1.msra.mxu0 0.0
        %499 = vmatprep.subr.mxu0 0.0
        %500 = vmatpush1.msra.mxu0 0.0
        %501 = vmatprep.subr.mxu0 0.0
        %502 = vmatpush1.msra.mxu0 0.0
        %503 = vmatprep.subr.mxu0 0.0
        %504 = vmatpush1.msra.mxu0 0.0
        %505 = vmatprep.subr.mxu0 0.0
        %506 = vmatpush1.msra.mxu0 0.0
        %507 = vmatprep.subr.mxu0 0.0
        %508 = vmatpush1.msra.mxu0 0.0
        %509 = vmatprep.subr.mxu0 0.0
        %510 = vmatpush1.msra.mxu0 0.0
        %511 = vmatprep.subr.mxu0 0.0
        %512 = vmatpush1.msra.mxu0 0.0
        %513 = vmatprep.subr.mxu0 0.0
        %514 = vmatpush1.msra.mxu0 0.0
        %515 = vmatprep.subr.mxu0 0.0
        %516 = vmatpush1.msra.mxu0 0.0
        %517 = vmatprep.subr.mxu0 0.0
        %518 = vmatpush1.msra.mxu0 0.0
        %519 = vmatprep.subr.mxu0 0.0
        %520 = vmatpush1.msra.mxu0 0.0
        %521 = vmatprep.subr.mxu0 0.0
        %522 = vmatpush1.msra.mxu0 0.0
        %523 = vmatprep.subr.mxu0 0.0
        %524 = vmatpush1.msra.mxu0 0.0
        %525 = vmatprep.subr.mxu0 0.0
        %526 = vmatpush1.msra.mxu0 0.0
        %527 = vmatprep.subr.mxu0 0.0
        %528 = vmatpush1.msra.mxu0 0.0
        %529 = vmatprep.subr.mxu0 0.0
        %530 = vmatpush1.msra.mxu0 0.0
        %531 = vmatprep.subr.mxu0 0.0
        %532 = vmatpush1.msra.mxu0 0.0
        %533 = vmatprep.subr.mxu0 0.0
        %534 = vmatpush1.msra.mxu0 0.0
        %535 = vmatprep.subr.mxu0 0.0
        %536 = vmatpush1.msra.mxu0 0.0
        %537 = vmatprep.mubr.f32.mxu0 0.0
        %538 = vmatmul.mubr.f32.gmra.mrb[0].mxu0 %v378
        %v539 = vpop.f32.mrb[0].mxu0
        %v540 = vadd.f32 %v374, %v539
        %v541 = vpop.f32.mrb[0].mxu0
        %542 = vmatprep.mubr.f32.mxu0 0.0
        %543 = vmatmul.mubr.f32.gmra.mrb[0].mxu0 %v381
        %v544 = vpop.f32.mrb[0].mxu0
        %v545 = vadd.f32 %v374, %v544
        %v546 = vpop.f32.mrb[0].mxu0
        %547 = vmatprep.mubr.f32.mxu0 0.0
        %548 = vmatmul.mubr.f32.gmra.mrb[0].mxu0 %v384
        %v549 = vpop.f32.mrb[0].mxu0
        %v550 = vadd.f32 %v374, %v549
        %v551 = vpop.f32.mrb[0].mxu0
        %552 = vmatprep.mubr.f32.mxu0 0.0
        %553 = vmatmul.mubr.f32.gmra.mrb[0].mxu0 %v387
        %v554 = vpop.f32.mrb[0].mxu0
        %v555 = vadd.f32 %v374, %v554
        %v556 = vpop.f32.mrb[0].mxu0
        %557 = vmatprep.mubr.f32.mxu0 0.0
        %558 = vmatmul.mubr.f32.gmra.mrb[0].mxu0 %v390
        %v559 = vpop.f32.mrb[0].mxu0
        %v560 = vadd.f32 %v374, %v559
        %v561 = vpop.f32.mrb[0].mxu0
        %562 = vmatprep.mubr.f32.mxu0 0.0
        %563 = vmatmul.mubr.f32.gmra.mrb[0].mxu0 %v393
        %v564 = vpop.f32.mrb[0].mxu0
        %v565 = vadd.f32 %v374, %v564
        %v566 = vpop.f32.mrb[0].mxu0
        %567 = vmatprep.mubr.f32.mxu0 0.0
        %568 = vmatmul.mubr.f32.gmra.mrb[0].mxu0 %v396
        %v569 = vpop.f32.mrb[0].mxu0
        %v570 = vadd.f32 %v374, %v569
        %v571 = vpop.f32.mrb[0].mxu0
        %572 = vmatprep.mubr.f32.mxu0 0.0
        %573 = vmatmul.mubr.f32.gmra.mrb[0].mxu0 %v399
        %v574 = vpop.f32.mrb[0].mxu0
        %v575 = vadd.f32 %v374, %v574
        %v576 = vpop.f32.mrb[0].mxu0
        %577 = vmatprep.mubr.f32.mxu0 0.0
        %578 = vmatmul.mubr.f32.gmra.mrb[0].mxu0 %v402
        %v579 = vpop.f32.mrb[0].mxu0
        %v580 = vadd.f32 %v374, %v579
        %v581 = vpop.f32.mrb[0].mxu0
        %582 = vmatprep.mubr.f32.mxu0 0.0
        %583 = vmatmul.mubr.f32.gmra.mrb[0].mxu0 %v405
        %v584 = vpop.f32.mrb[0].mxu0
        %v585 = vadd.f32 %v374, %v584
        %v586 = vpop.f32.mrb[0].mxu0
        %587 = vmatprep.mubr.f32.mxu0 0.0
        %588 = vmatmul.mubr.f32.gmra.mrb[0].mxu0 %v408
        %v589 = vpop.f32.mrb[0].mxu0
        %v590 = vadd.f32 %v374, %v589
        %v591 = vpop.f32.mrb[0].mxu0
        %592 = vmatprep.mubr.f32.mxu0 0.0
        %593 = vmatmul.mubr.f32.gmra.mrb[0].mxu0 %v411
        %v594 = vpop.f32.mrb[0].mxu0
        %v595 = vadd.f32 %v374, %v594
        %v596 = vpop.f32.mrb[0].mxu0
        %597 = vmatprep.mubr.f32.mxu0 0.0
        %598 = vmatmul.mubr.f32.gmra.mrb[0].mxu0 %v414
        %v599 = vpop.f32.mrb[0].mxu0
        %v600 = vadd.f32 %v374, %v599
        %v601 = vpop.f32.mrb[0].mxu0
        %602 = vmatprep.mubr.f32.mxu0 0.0
        %603 = vmatmul.mubr.f32.gmra.mrb[0].mxu0 %v417
        %v604 = vpop.f32.mrb[0].mxu0
        %v605 = vadd.f32 %v374, %v604
        %v606 = vpop.f32.mrb[0].mxu0
        %607 = vmatprep.mubr.f32.mxu0 0.0
        %608 = vmatmul.mubr.f32.gmra.mrb[0].mxu0 %v420
        %v609 = vpop.f32.mrb[0].mxu0
        %v610 = vadd.f32 %v374, %v609
        %v611 = vpop.f32.mrb[0].mxu0
        %612 = vmatprep.mubr.f32.mxu0 0.0
        %613 = vmatmul.mubr.f32.gmra.mrb[0].mxu0 %v423
        %v614 = vpop.f32.mrb[0].mxu0
        %v615 = vadd.f32 %v374, %v614
        %v616 = vpop.f32.mrb[0].mxu0
        %617 = vmatprep.mubr.f32.mxu0 0.0
        %618 = vmatmul.mubr.f32.gmra.mrb[0].mxu0 %v426
        %v619 = vpop.f32.mrb[0].mxu0
        %v620 = vadd.f32 %v374, %v619
        %v621 = vpop.f32.mrb[0].mxu0
        %622 = vmatprep.mubr.f32.mxu0 0.0
        %623 = vmatmul.mubr.f32.gmra.mrb[0].mxu0 %v429
        %v624 = vpop.f32.mrb[0].mxu0
        %v625 = vadd.f32 %v374, %v624
        %v626 = vpop.f32.mrb[0].mxu0
        %627 = vmatprep.mubr.f32.mxu0 0.0
        %628 = vmatmul.mubr.f32.gmra.mrb[0].mxu0 %v432
        %v629 = vpop.f32.mrb[0].mxu0
        %v630 = vadd.f32 %v374, %v629
        %v631 = vpop.f32.mrb[0].mxu0
        %632 = vmatprep.mubr.f32.mxu0 0.0
        %633 = vmatmul.mubr.f32.gmra.mrb[0].mxu0 %v435
        %v634 = vpop.f32.mrb[0].mxu0
        %v635 = vadd.f32 %v374, %v634
        %v636 = vpop.f32.mrb[0].mxu0
        %637 = vmatprep.mubr.f32.mxu0 0.0
        %638 = vmatmul.mubr.f32.gmra.mrb[0].mxu0 %v438
        %v639 = vpop.f32.mrb[0].mxu0
        %v640 = vadd.f32 %v374, %v639
        %v641 = vpop.f32.mrb[0].mxu0
        %642 = vmatprep.mubr.f32.mxu0 0.0
        %643 = vmatmul.mubr.f32.gmra.mrb[0].mxu0 %v441
        %v644 = vpop.f32.mrb[0].mxu0
        %v645 = vadd.f32 %v374, %v644
        %v646 = vpop.f32.mrb[0].mxu0
        %647 = vmatprep.mubr.f32.mxu0 0.0
        %648 = vmatmul.mubr.f32.gmra.mrb[0].mxu0 %v444
        %v649 = vpop.f32.mrb[0].mxu0
        %v650 = vadd.f32 %v374, %v649
        %v651 = vpop.f32.mrb[0].mxu0
        %652 = vmatprep.mubr.f32.mxu0 0.0
        %653 = vmatmul.mubr.f32.gmra.mrb[0].mxu0 %v447
        %v654 = vpop.f32.mrb[0].mxu0
        %v655 = vadd.f32 %v374, %v654
        %v656 = vpop.f32.mrb[0].mxu0
        %657 = vmatprep.mubr.f32.mxu0 0.0
        %658 = vmatmul.mubr.f32.gmra.mrb[0].mxu0 %v450
        %v659 = vpop.f32.mrb[0].mxu0
        %v660 = vadd.f32 %v374, %v659
        %v661 = vpop.f32.mrb[0].mxu0
        %662 = vmatprep.mubr.f32.mxu0 0.0
        %663 = vmatmul.mubr.f32.gmra.mrb[0].mxu0 %v453
        %v664 = vpop.f32.mrb[0].mxu0
        %v665 = vadd.f32 %v374, %v664
        %v666 = vpop.f32.mrb[0].mxu0
        %667 = vmatprep.mubr.f32.mxu0 0.0
        %668 = vmatmul.mubr.f32.gmra.mrb[0].mxu0 %v456
        %v669 = vpop.f32.mrb[0].mxu0
        %v670 = vadd.f32 %v374, %v669
        %v671 = vpop.f32.mrb[0].mxu0
        %672 = vmatprep.mubr.f32.mxu0 0.0
        %673 = vmatmul.mubr.f32.gmra.mrb[0].mxu0 %v459
        %v674 = vpop.f32.mrb[0].mxu0
        %v675 = vadd.f32 %v374, %v674
        %v676 = vpop.f32.mrb[0].mxu0
        %677 = vmatprep.mubr.f32.mxu0 0.0
        %678 = vmatmul.mubr.f32.gmra.mrb[0].mxu0 %v462
        %v679 = vpop.f32.mrb[0].mxu0
        %v680 = vadd.f32 %v374, %v679
        %v681 = vpop.f32.mrb[0].mxu0
        %682 = vmatprep.mubr.f32.mxu0 0.0
        %683 = vmatmul.mubr.f32.gmra.mrb[0].mxu0 %v465
        %v684 = vpop.f32.mrb[0].mxu0
        %v685 = vadd.f32 %v374, %v684
        %v686 = vpop.f32.mrb[0].mxu0
        %687 = vmatprep.mubr.f32.mxu0 0.0
        %688 = vmatmul.mubr.f32.gmra.mrb[0].mxu0 %v468
        %v689 = vpop.f32.mrb[0].mxu0
        %v690 = vadd.f32 %v374, %v689
        %v691 = vpop.f32.mrb[0].mxu0
        %692 = vmatprep.mubr.f32.mxu0 0.0
        %693 = vmatmul.mubr.f32.gmra.mrb[0].mxu0 %v471
        %v694 = vpop.f32.mrb[0].mxu0
        %v695 = vadd.f32 %v374, %v694
        %v696 = vpop.f32.mrb[0].mxu0
        %697 = vdwg.mxu0
        %v698 = vxor.u32 %v540, 2147483648
        %v699 = vxor.u32 %v545, 2147483648
        %v700 = vxor.u32 %v550, 2147483648
        %v701 = vxor.u32 %v555, 2147483648
        %v702 = vxor.u32 %v560, 2147483648
        %v703 = vxor.u32 %v565, 2147483648
        %v704 = vxor.u32 %v570, 2147483648
        %v705 = vxor.u32 %v575, 2147483648
        %v706 = vxor.u32 %v580, 2147483648
        %v707 = vxor.u32 %v585, 2147483648
        %v708 = vxor.u32 %v590, 2147483648
        %v709 = vxor.u32 %v595, 2147483648
        %v710 = vxor.u32 %v600, 2147483648
        %v711 = vxor.u32 %v605, 2147483648
        %v712 = vxor.u32 %v610, 2147483648
        %v713 = vxor.u32 %v615, 2147483648
        %v714 = vxor.u32 %v620, 2147483648
        %v715 = vxor.u32 %v625, 2147483648
        %v716 = vxor.u32 %v630, 2147483648
        %v717 = vxor.u32 %v635, 2147483648
        %v718 = vxor.u32 %v640, 2147483648
        %v719 = vxor.u32 %v645, 2147483648
        %v720 = vxor.u32 %v650, 2147483648
        %v721 = vxor.u32 %v655, 2147483648
        %v722 = vxor.u32 %v660, 2147483648
        %v723 = vxor.u32 %v665, 2147483648
        %v724 = vxor.u32 %v670, 2147483648
        %v725 = vxor.u32 %v675, 2147483648
        %v726 = vxor.u32 %v680, 2147483648
        %v727 = vxor.u32 %v685, 2147483648
        %v728 = vxor.u32 %v690, 2147483648
        %v729 = vxor.u32 %v695, 2147483648
        %v730 = vmul.f32 %v698, 1.442695
        %v731 = vpow.pop %v730
        %v732 = vmul.f32 %v699, 1.442695
        %v733 = vpow.pop %v732
        %v734 = vmul.f32 %v700, 1.442695
        %v735 = vpow.pop %v734
        %v736 = vmul.f32 %v701, 1.442695
        %v737 = vpow.pop %v736
        %v738 = vmul.f32 %v702, 1.442695
        %v739 = vpow.pop %v738
        %v740 = vmul.f32 %v703, 1.442695
        %v741 = vpow.pop %v740
        %v742 = vmul.f32 %v704, 1.442695
        %v743 = vpow.pop %v742
        %v744 = vmul.f32 %v705, 1.442695
        %v745 = vpow.pop %v744
        %v746 = vmul.f32 %v706, 1.442695
        %v747 = vpow.pop %v746
        %v748 = vmul.f32 %v707, 1.442695
        %v749 = vpow.pop %v748
        %v750 = vmul.f32 %v708, 1.442695
        %v751 = vpow.pop %v750
        %v752 = vmul.f32 %v709, 1.442695
        %v753 = vpow.pop %v752
        %v754 = vmul.f32 %v710, 1.442695
        %v755 = vpow.pop %v754
        %v756 = vmul.f32 %v711, 1.442695
        %v757 = vpow.pop %v756
        %v758 = vmul.f32 %v712, 1.442695
        %v759 = vpow.pop %v758
        %v760 = vmul.f32 %v713, 1.442695
        %v761 = vpow.pop %v760
        %v762 = vmul.f32 %v714, 1.442695
        %v763 = vpow.pop %v762
        %v764 = vmul.f32 %v715, 1.442695
        %v765 = vpow.pop %v764
        %v766 = vmul.f32 %v716, 1.442695
        %v767 = vpow.pop %v766
        %v768 = vmul.f32 %v717, 1.442695
        %v769 = vpow.pop %v768
        %v770 = vmul.f32 %v718, 1.442695
        %v771 = vpow.pop %v770
        %v772 = vmul.f32 %v719, 1.442695
        %v773 = vpow.pop %v772
        %v774 = vmul.f32 %v720, 1.442695
        %v775 = vpow.pop %v774
        %v776 = vmul.f32 %v721, 1.442695
        %v777 = vpow.pop %v776
        %v778 = vmul.f32 %v722, 1.442695
        %v779 = vpow.pop %v778
        %v780 = vmul.f32 %v723, 1.442695
        %v781 = vpow.pop %v780
        %v782 = vmul.f32 %v724, 1.442695
        %v783 = vpow.pop %v782
        %v784 = vmul.f32 %v725, 1.442695
        %v785 = vpow.pop %v784
        %v786 = vmul.f32 %v726, 1.442695
        %v787 = vpow.pop %v786
        %v788 = vmul.f32 %v727, 1.442695
        %v789 = vpow.pop %v788
        %v790 = vmul.f32 %v728, 1.442695
        %v791 = vpow.pop %v790
        %v792 = vmul.f32 %v729, 1.442695
        %v793 = vpow.pop %v792
        %v794 = vadd.f32 %v731, 1.0
        %v795 = vadd.f32 %v733, 1.0
        %v796 = vadd.f32 %v735, 1.0
        %v797 = vadd.f32 %v737, 1.0
        %v798 = vadd.f32 %v739, 1.0
        %v799 = vadd.f32 %v741, 1.0
        %v800 = vadd.f32 %v743, 1.0
        %v801 = vadd.f32 %v745, 1.0
        %v802 = vadd.f32 %v747, 1.0
        %v803 = vadd.f32 %v749, 1.0
        %v804 = vadd.f32 %v751, 1.0
        %v805 = vadd.f32 %v753, 1.0
        %v806 = vadd.f32 %v755, 1.0
        %v807 = vadd.f32 %v757, 1.0
        %v808 = vadd.f32 %v759, 1.0
        %v809 = vadd.f32 %v761, 1.0
        %v810 = vadd.f32 %v763, 1.0
        %v811 = vadd.f32 %v765, 1.0
        %v812 = vadd.f32 %v767, 1.0
        %v813 = vadd.f32 %v769, 1.0
        %v814 = vadd.f32 %v771, 1.0
        %v815 = vadd.f32 %v773, 1.0
        %v816 = vadd.f32 %v775, 1.0
        %v817 = vadd.f32 %v777, 1.0
        %v818 = vadd.f32 %v779, 1.0
        %v819 = vadd.f32 %v781, 1.0
        %v820 = vadd.f32 %v783, 1.0
        %v821 = vadd.f32 %v785, 1.0
        %v822 = vadd.f32 %v787, 1.0
        %v823 = vadd.f32 %v789, 1.0
        %v824 = vadd.f32 %v791, 1.0
        %v825 = vadd.f32 %v793, 1.0
        %v826 = vrcp.pop %v794
        %v827 = vmul.f32 1.0, %v826
        %v828 = vrcp.pop %v795
        %v829 = vmul.f32 1.0, %v828
        %v830 = vrcp.pop %v796
        %v831 = vmul.f32 1.0, %v830
        %v832 = vrcp.pop %v797
        %v833 = vmul.f32 1.0, %v832
        %v834 = vrcp.pop %v798
        %v835 = vmul.f32 1.0, %v834
        %v836 = vrcp.pop %v799
        %v837 = vmul.f32 1.0, %v836
        %v838 = vrcp.pop %v800
        %v839 = vmul.f32 1.0, %v838
        %v840 = vrcp.pop %v801
        %v841 = vmul.f32 1.0, %v840
        %v842 = vrcp.pop %v802
        %v843 = vmul.f32 1.0, %v842
        %v844 = vrcp.pop %v803
        %v845 = vmul.f32 1.0, %v844
        %v846 = vrcp.pop %v804
        %v847 = vmul.f32 1.0, %v846
        %v848 = vrcp.pop %v805
        %v849 = vmul.f32 1.0, %v848
        %v850 = vrcp.pop %v806
        %v851 = vmul.f32 1.0, %v850
        %v852 = vrcp.pop %v807
        %v853 = vmul.f32 1.0, %v852
        %v854 = vrcp.pop %v808
        %v855 = vmul.f32 1.0, %v854
        %v856 = vrcp.pop %v809
        %v857 = vmul.f32 1.0, %v856
        %v858 = vrcp.pop %v810
        %v859 = vmul.f32 1.0, %v858
        %v860 = vrcp.pop %v811
        %v861 = vmul.f32 1.0, %v860
        %v862 = vrcp.pop %v812
        %v863 = vmul.f32 1.0, %v862
        %v864 = vrcp.pop %v813
        %v865 = vmul.f32 1.0, %v864
        %v866 = vrcp.pop %v814
        %v867 = vmul.f32 1.0, %v866
        %v868 = vrcp.pop %v815
        %v869 = vmul.f32 1.0, %v868
        %v870 = vrcp.pop %v816
        %v871 = vmul.f32 1.0, %v870
        %v872 = vrcp.pop %v817
        %v873 = vmul.f32 1.0, %v872
        %v874 = vrcp.pop %v818
        %v875 = vmul.f32 1.0, %v874
        %v876 = vrcp.pop %v819
        %v877 = vmul.f32 1.0, %v876
        %v878 = vrcp.pop %v820
        %v879 = vmul.f32 1.0, %v878
        %v880 = vrcp.pop %v821
        %v881 = vmul.f32 1.0, %v880
        %v882 = vrcp.pop %v822
        %v883 = vmul.f32 1.0, %v882
        %v884 = vrcp.pop %v823
        %v885 = vmul.f32 1.0, %v884
        %v886 = vrcp.pop %v824
        %v887 = vmul.f32 1.0, %v886
        %v888 = vrcp.pop %v825
        %v889 = vmul.f32 1.0, %v888
        %v890 = vmul.f32 %v540, %v827
        %v891 = vmul.f32 %v545, %v829
        %v892 = vmul.f32 %v550, %v831
        %v893 = vmul.f32 %v555, %v833
        %v894 = vmul.f32 %v560, %v835
        %v895 = vmul.f32 %v565, %v837
        %v896 = vmul.f32 %v570, %v839
        %v897 = vmul.f32 %v575, %v841
        %v898 = vmul.f32 %v580, %v843
        %v899 = vmul.f32 %v585, %v845
        %v900 = vmul.f32 %v590, %v847
        %v901 = vmul.f32 %v595, %v849
        %v902 = vmul.f32 %v600, %v851
        %v903 = vmul.f32 %v605, %v853
        %v904 = vmul.f32 %v610, %v855
        %v905 = vmul.f32 %v615, %v857
        %v906 = vmul.f32 %v620, %v859
        %v907 = vmul.f32 %v625, %v861
        %v908 = vmul.f32 %v630, %v863
        %v909 = vmul.f32 %v635, %v865
        %v910 = vmul.f32 %v640, %v867
        %v911 = vmul.f32 %v645, %v869
        %v912 = vmul.f32 %v650, %v871
        %v913 = vmul.f32 %v655, %v873
        %v914 = vmul.f32 %v660, %v875
        %v915 = vmul.f32 %v665, %v877
        %v916 = vmul.f32 %v670, %v879
        %v917 = vmul.f32 %v675, %v881
        %v918 = vmul.f32 %v680, %v883
        %v919 = vmul.f32 %v685, %v885
        %v920 = vmul.f32 %v690, %v887
        %v921 = vmul.f32 %v695, %v889
        %v922 = vld [vmem:[%s321] sm:$0xff]
        %v923 = vld [vmem:[%s321 + $0x8] sm:$0xff]
        %v924 = vld [vmem:[%s321 + $0x10] sm:$0xff]
        %v925 = vld [vmem:[%s321 + $0x18] sm:$0xff]
        %v926 = vld [vmem:[%s321 + $0x20] sm:$0xff]
        %v927 = vld [vmem:[%s321 + $0x28] sm:$0xff]
        %v928 = vld [vmem:[%s321 + $0x30] sm:$0xff]
        %v929 = vld [vmem:[%s321 + $0x38] sm:$0xff]
        %v930 = vld [vmem:[%s321 + $0x40] sm:$0xff]
        %v931 = vld [vmem:[%s321 + $0x48] sm:$0xff]
        %v932 = vld [vmem:[%s321 + $0x50] sm:$0xff]
        %v933 = vld [vmem:[%s321 + $0x58] sm:$0xff]
        %v934 = vld [vmem:[%s321 + $0x60] sm:$0xff]
        %v935 = vld [vmem:[%s321 + $0x68] sm:$0xff]
        %v936 = vld [vmem:[%s321 + $0x70] sm:$0xff]
        %v937 = vld [vmem:[%s321 + $0x78] sm:$0xff]
        %v938 = vld [vmem:[%s326] sm:$0x1]
        %v940 = vlaneseq
        %v941 = vshrl.u32 %v940, 7
        %v942 = vsub.s32 0, %v941
        %v943 = vrot.slane %v938, %v942
        %945 = vmatprep.subr.mxu0 0.0
        %946 = vmatpush1.msra.mxu0 %v922
        %947 = vmatprep.subr.mxu0 0.0
        %948 = vmatpush1.msra.mxu0 %v923
        %949 = vmatprep.subr.mxu0 0.0
        %950 = vmatpush1.msra.mxu0 %v924
        %951 = vmatprep.subr.mxu0 0.0
        %952 = vmatpush1.msra.mxu0 %v925
        %953 = vmatprep.subr.mxu0 0.0
        %954 = vmatpush1.msra.mxu0 %v926
        %955 = vmatprep.subr.mxu0 0.0
        %956 = vmatpush1.msra.mxu0 %v927
        %957 = vmatprep.subr.mxu0 0.0
        %958 = vmatpush1.msra.mxu0 %v928
        %959 = vmatprep.subr.mxu0 0.0
        %960 = vmatpush1.msra.mxu0 %v929
        %961 = vmatprep.subr.mxu0 0.0
        %962 = vmatpush1.msra.mxu0 %v930
        %963 = vmatprep.subr.mxu0 0.0
        %964 = vmatpush1.msra.mxu0 %v931
        %965 = vmatprep.subr.mxu0 0.0
        %966 = vmatpush1.msra.mxu0 %v932
        %967 = vmatprep.subr.mxu0 0.0
        %968 = vmatpush1.msra.mxu0 %v933
        %969 = vmatprep.subr.mxu0 0.0
        %970 = vmatpush1.msra.mxu0 %v934
        %971 = vmatprep.subr.mxu0 0.0
        %972 = vmatpush1.msra.mxu0 %v935
        %973 = vmatprep.subr.mxu0 0.0
        %974 = vmatpush1.msra.mxu0 %v936
        %975 = vmatprep.subr.mxu0 0.0
        %976 = vmatpush1.msra.mxu0 %v937
        %977 = vmatprep.subr.mxu0 0.0
        %978 = vmatpush1.msra.mxu0 0.0
        %979 = vmatprep.subr.mxu0 0.0
        %980 = vmatpush1.msra.mxu0 0.0
        %981 = vmatprep.subr.mxu0 0.0
        %982 = vmatpush1.msra.mxu0 0.0
        %983 = vmatprep.subr.mxu0 0.0
        %984 = vmatpush1.msra.mxu0 0.0
        %985 = vmatprep.subr.mxu0 0.0
        %986 = vmatpush1.msra.mxu0 0.0
        %987 = vmatprep.subr.mxu0 0.0
        %988 = vmatpush1.msra.mxu0 0.0
        %989 = vmatprep.subr.mxu0 0.0
        %990 = vmatpush1.msra.mxu0 0.0
        %991 = vmatprep.subr.mxu0 0.0
        %992 = vmatpush1.msra.mxu0 0.0
        %993 = vmatprep.subr.mxu0 0.0
        %994 = vmatpush1.msra.mxu0 0.0
        %995 = vmatprep.subr.mxu0 0.0
        %996 = vmatpush1.msra.mxu0 0.0
        %997 = vmatprep.subr.mxu0 0.0
        %998 = vmatpush1.msra.mxu0 0.0
        %999 = vmatprep.subr.mxu0 0.0
        %1000 = vmatpush1.msra.mxu0 0.0
        %1001 = vmatprep.subr.mxu0 0.0
        %1002 = vmatpush1.msra.mxu0 0.0
        %1003 = vmatprep.subr.mxu0 0.0
        %1004 = vmatpush1.msra.mxu0 0.0
        %1005 = vmatprep.subr.mxu0 0.0
        %1006 = vmatpush1.msra.mxu0 0.0
        %1007 = vmatprep.subr.mxu0 0.0
        %1008 = vmatpush1.msra.mxu0 0.0
        %1009 = vmatprep.mubr.f32.mxu0 0.0
        %1010 = vmatmul.mubr.f32.gmra.mrb[0].mxu0 %v890
        %v1011 = vpop.f32.mrb[0].mxu0
        %v1012 = vadd.f32 %v943, %v1011
        %v1013 = vpop.f32.mrb[0].mxu0
        %1014 = vmatprep.mubr.f32.mxu0 0.0
        %1015 = vmatmul.mubr.f32.gmra.mrb[0].mxu0 %v891
        %v1016 = vpop.f32.mrb[0].mxu0
        %v1017 = vadd.f32 %v943, %v1016
        %v1018 = vpop.f32.mrb[0].mxu0
        %1019 = vmatprep.mubr.f32.mxu0 0.0
        %1020 = vmatmul.mubr.f32.gmra.mrb[0].mxu0 %v892
        %v1021 = vpop.f32.mrb[0].mxu0
        %v1022 = vadd.f32 %v943, %v1021
        %v1023 = vpop.f32.mrb[0].mxu0
        %1024 = vmatprep.mubr.f32.mxu0 0.0
        %1025 = vmatmul.mubr.f32.gmra.mrb[0].mxu0 %v893
        %v1026 = vpop.f32.mrb[0].mxu0
        %v1027 = vadd.f32 %v943, %v1026
        %v1028 = vpop.f32.mrb[0].mxu0
        %1029 = vmatprep.mubr.f32.mxu0 0.0
        %1030 = vmatmul.mubr.f32.gmra.mrb[0].mxu0 %v894
        %v1031 = vpop.f32.mrb[0].mxu0
        %v1032 = vadd.f32 %v943, %v1031
        %v1033 = vpop.f32.mrb[0].mxu0
        %1034 = vmatprep.mubr.f32.mxu0 0.0
        %1035 = vmatmul.mubr.f32.gmra.mrb[0].mxu0 %v895
        %v1036 = vpop.f32.mrb[0].mxu0
        %v1037 = vadd.f32 %v943, %v1036
        %v1038 = vpop.f32.mrb[0].mxu0
        %1039 = vmatprep.mubr.f32.mxu0 0.0
        %1040 = vmatmul.mubr.f32.gmra.mrb[0].mxu0 %v896
        %v1041 = vpop.f32.mrb[0].mxu0
        %v1042 = vadd.f32 %v943, %v1041
        %v1043 = vpop.f32.mrb[0].mxu0
        %1044 = vmatprep.mubr.f32.mxu0 0.0
        %1045 = vmatmul.mubr.f32.gmra.mrb[0].mxu0 %v897
        %v1046 = vpop.f32.mrb[0].mxu0
        %v1047 = vadd.f32 %v943, %v1046
        %v1048 = vpop.f32.mrb[0].mxu0
        %1049 = vmatprep.mubr.f32.mxu0 0.0
        %1050 = vmatmul.mubr.f32.gmra.mrb[0].mxu0 %v898
        %v1051 = vpop.f32.mrb[0].mxu0
        %v1052 = vadd.f32 %v943, %v1051
        %v1053 = vpop.f32.mrb[0].mxu0
        %1054 = vmatprep.mubr.f32.mxu0 0.0
        %1055 = vmatmul.mubr.f32.gmra.mrb[0].mxu0 %v899
        %v1056 = vpop.f32.mrb[0].mxu0
        %v1057 = vadd.f32 %v943, %v1056
        %v1058 = vpop.f32.mrb[0].mxu0
        %1059 = vmatprep.mubr.f32.mxu0 0.0
        %1060 = vmatmul.mubr.f32.gmra.mrb[0].mxu0 %v900
        %v1061 = vpop.f32.mrb[0].mxu0
        %v1062 = vadd.f32 %v943, %v1061
        %v1063 = vpop.f32.mrb[0].mxu0
        %1064 = vmatprep.mubr.f32.mxu0 0.0
        %1065 = vmatmul.mubr.f32.gmra.mrb[0].mxu0 %v901
        %v1066 = vpop.f32.mrb[0].mxu0
        %v1067 = vadd.f32 %v943, %v1066
        %v1068 = vpop.f32.mrb[0].mxu0
        %1069 = vmatprep.mubr.f32.mxu0 0.0
        %1070 = vmatmul.mubr.f32.gmra.mrb[0].mxu0 %v902
        %v1071 = vpop.f32.mrb[0].mxu0
        %v1072 = vadd.f32 %v943, %v1071
        %v1073 = vpop.f32.mrb[0].mxu0
        %1074 = vmatprep.mubr.f32.mxu0 0.0
        %1075 = vmatmul.mubr.f32.gmra.mrb[0].mxu0 %v903
        %v1076 = vpop.f32.mrb[0].mxu0
        %v1077 = vadd.f32 %v943, %v1076
        %v1078 = vpop.f32.mrb[0].mxu0
        %1079 = vmatprep.mubr.f32.mxu0 0.0
        %1080 = vmatmul.mubr.f32.gmra.mrb[0].mxu0 %v904
        %v1081 = vpop.f32.mrb[0].mxu0
        %v1082 = vadd.f32 %v943, %v1081
        %v1083 = vpop.f32.mrb[0].mxu0
        %1084 = vmatprep.mubr.f32.mxu0 0.0
        %1085 = vmatmul.mubr.f32.gmra.mrb[0].mxu0 %v905
        %v1086 = vpop.f32.mrb[0].mxu0
        %v1087 = vadd.f32 %v943, %v1086
        %v1088 = vpop.f32.mrb[0].mxu0
        %1089 = vmatprep.mubr.f32.mxu0 0.0
        %1090 = vmatmul.mubr.f32.gmra.mrb[0].mxu0 %v906
        %v1091 = vpop.f32.mrb[0].mxu0
        %v1092 = vadd.f32 %v943, %v1091
        %v1093 = vpop.f32.mrb[0].mxu0
        %1094 = vmatprep.mubr.f32.mxu0 0.0
        %1095 = vmatmul.mubr.f32.gmra.mrb[0].mxu0 %v907
        %v1096 = vpop.f32.mrb[0].mxu0
        %v1097 = vadd.f32 %v943, %v1096
        %v1098 = vpop.f32.mrb[0].mxu0
        %1099 = vmatprep.mubr.f32.mxu0 0.0
        %1100 = vmatmul.mubr.f32.gmra.mrb[0].mxu0 %v908
        %v1101 = vpop.f32.mrb[0].mxu0
        %v1102 = vadd.f32 %v943, %v1101
        %v1103 = vpop.f32.mrb[0].mxu0
        %1104 = vmatprep.mubr.f32.mxu0 0.0
        %1105 = vmatmul.mubr.f32.gmra.mrb[0].mxu0 %v909
        %v1106 = vpop.f32.mrb[0].mxu0
        %v1107 = vadd.f32 %v943, %v1106
        %v1108 = vpop.f32.mrb[0].mxu0
        %1109 = vmatprep.mubr.f32.mxu0 0.0
        %1110 = vmatmul.mubr.f32.gmra.mrb[0].mxu0 %v910
        %v1111 = vpop.f32.mrb[0].mxu0
        %v1112 = vadd.f32 %v943, %v1111
        %v1113 = vpop.f32.mrb[0].mxu0
        %1114 = vmatprep.mubr.f32.mxu0 0.0
        %1115 = vmatmul.mubr.f32.gmra.mrb[0].mxu0 %v911
        %v1116 = vpop.f32.mrb[0].mxu0
        %v1117 = vadd.f32 %v943, %v1116
        %v1118 = vpop.f32.mrb[0].mxu0
        %1119 = vmatprep.mubr.f32.mxu0 0.0
        %1120 = vmatmul.mubr.f32.gmra.mrb[0].mxu0 %v912
        %v1121 = vpop.f32.mrb[0].mxu0
        %v1122 = vadd.f32 %v943, %v1121
        %v1123 = vpop.f32.mrb[0].mxu0
        %1124 = vmatprep.mubr.f32.mxu0 0.0
        %1125 = vmatmul.mubr.f32.gmra.mrb[0].mxu0 %v913
        %v1126 = vpop.f32.mrb[0].mxu0
        %v1127 = vadd.f32 %v943, %v1126
        %v1128 = vpop.f32.mrb[0].mxu0
        %1129 = vmatprep.mubr.f32.mxu0 0.0
        %1130 = vmatmul.mubr.f32.gmra.mrb[0].mxu0 %v914
        %v1131 = vpop.f32.mrb[0].mxu0
        %v1132 = vadd.f32 %v943, %v1131
        %v1133 = vpop.f32.mrb[0].mxu0
        %1134 = vmatprep.mubr.f32.mxu0 0.0
        %1135 = vmatmul.mubr.f32.gmra.mrb[0].mxu0 %v915
        %v1136 = vpop.f32.mrb[0].mxu0
        %v1137 = vadd.f32 %v943, %v1136
        %v1138 = vpop.f32.mrb[0].mxu0
        %1139 = vmatprep.mubr.f32.mxu0 0.0
        %1140 = vmatmul.mubr.f32.gmra.mrb[0].mxu0 %v916
        %v1141 = vpop.f32.mrb[0].mxu0
        %v1142 = vadd.f32 %v943, %v1141
        %v1143 = vpop.f32.mrb[0].mxu0
        %1144 = vmatprep.mubr.f32.mxu0 0.0
        %1145 = vmatmul.mubr.f32.gmra.mrb[0].mxu0 %v917
        %v1146 = vpop.f32.mrb[0].mxu0
        %v1147 = vadd.f32 %v943, %v1146
        %v1148 = vpop.f32.mrb[0].mxu0
        %1149 = vmatprep.mubr.f32.mxu0 0.0
        %1150 = vmatmul.mubr.f32.gmra.mrb[0].mxu0 %v918
        %v1151 = vpop.f32.mrb[0].mxu0
        %v1152 = vadd.f32 %v943, %v1151
        %v1153 = vpop.f32.mrb[0].mxu0
        %1154 = vmatprep.mubr.f32.mxu0 0.0
        %1155 = vmatmul.mubr.f32.gmra.mrb[0].mxu0 %v919
        %v1156 = vpop.f32.mrb[0].mxu0
        %v1157 = vadd.f32 %v943, %v1156
        %v1158 = vpop.f32.mrb[0].mxu0
        %1159 = vmatprep.mubr.f32.mxu0 0.0
        %1160 = vmatmul.mubr.f32.gmra.mrb[0].mxu0 %v920
        %v1161 = vpop.f32.mrb[0].mxu0
        %v1162 = vadd.f32 %v943, %v1161
        %v1163 = vpop.f32.mrb[0].mxu0
        %1164 = vmatprep.mubr.f32.mxu0 0.0
        %1165 = vmatmul.mubr.f32.gmra.mrb[0].mxu0 %v921
        %v1166 = vpop.f32.mrb[0].mxu0
        %v1167 = vadd.f32 %v943, %v1166
        %v1168 = vpop.f32.mrb[0].mxu0
        %1169 = vdwg.mxu0
        %1170 = vst [vmem:[%s297] sm:$0xff] %v1012
        %1171 = vst [vmem:[%s297 + $0x8] sm:$0xff] %v1017
        %1172 = vst [vmem:[%s297 + $0x10] sm:$0xff] %v1022
        %1173 = vst [vmem:[%s297 + $0x18] sm:$0xff] %v1027
        %1174 = vst [vmem:[%s297 + $0x20] sm:$0xff] %v1032
        %1175 = vst [vmem:[%s297 + $0x28] sm:$0xff] %v1037
        %1176 = vst [vmem:[%s297 + $0x30] sm:$0xff] %v1042
        %1177 = vst [vmem:[%s297 + $0x38] sm:$0xff] %v1047
        %1178 = vst [vmem:[%s297 + $0x40] sm:$0xff] %v1052
        %1179 = vst [vmem:[%s297 + $0x48] sm:$0xff] %v1057
        %1180 = vst [vmem:[%s297 + $0x50] sm:$0xff] %v1062
        %1181 = vst [vmem:[%s297 + $0x58] sm:$0xff] %v1067
        %1182 = vst [vmem:[%s297 + $0x60] sm:$0xff] %v1072
        %1183 = vst [vmem:[%s297 + $0x68] sm:$0xff] %v1077
        %1184 = vst [vmem:[%s297 + $0x70] sm:$0xff] %v1082
        %1185 = vst [vmem:[%s297 + $0x78] sm:$0xff] %v1087
        %1186 = vst [vmem:[%s297 + $0x80] sm:$0xff] %v1092
        %1187 = vst [vmem:[%s297 + $0x88] sm:$0xff] %v1097
        %1188 = vst [vmem:[%s297 + $0x90] sm:$0xff] %v1102
        %1189 = vst [vmem:[%s297 + $0x98] sm:$0xff] %v1107
        %1190 = vst [vmem:[%s297 + $0xa0] sm:$0xff] %v1112
        %1191 = vst [vmem:[%s297 + $0xa8] sm:$0xff] %v1117
        %1192 = vst [vmem:[%s297 + $0xb0] sm:$0xff] %v1122
        %1193 = vst [vmem:[%s297 + $0xb8] sm:$0xff] %v1127
        %1194 = vst [vmem:[%s297 + $0xc0] sm:$0xff] %v1132
        %1195 = vst [vmem:[%s297 + $0xc8] sm:$0xff] %v1137
        %1196 = vst [vmem:[%s297 + $0xd0] sm:$0xff] %v1142
        %1197 = vst [vmem:[%s297 + $0xd8] sm:$0xff] %v1147
        %1198 = vst [vmem:[%s297 + $0xe0] sm:$0xff] %v1152
        %1199 = vst [vmem:[%s297 + $0xe8] sm:$0xff] %v1157
        %1200 = vst [vmem:[%s297 + $0xf0] sm:$0xff] %v1162
        %1201 = vst [vmem:[%s297 + $0xf8] sm:$0xff] %v1167
        %s1202 = sand.u32 %s172, 1
        %s1203 = scalar_lea.sflag [#allocation5], %s1202
        %s1204 = sand.u32 %s172, 1
        %s1205 = smul.addr %s1204, 256
        %s1206 = scalar_lea.vmem [#allocation4], %s1205
        // Predicated region
        $region41: #{tpu_custom_call.1} parent=39 // pred_check
          %p1207 = pneg %p182
        $region42: #{tpu_custom_call.1} parent=39 // pred_check_branch
          %1209 = sbr.rel (%p1207) target = $region44
        $region43: #{tpu_custom_call.1} parent=39 // pred_region
          %s1210 = smul.u32 32, %s26
          %s1212 = ssub.s32 4096, 4096
          %1213 = vsyncadd %s1203, %s1212
          %s1214 = smul.addr %s1210, 128
          %s1215 = scalar_lea.hbm %s6, %s1214
          %s1216 = sshll.u32 %s1206, 4
          %s1217 = int_to_ptr.vmem [resolvable:$true] %s1216
          %1222 = dma.vmem_to_hbm [thread:$0]  %s1217, 4096, %s1215, %s1203, 128, 128, 8
        $region44: #{tpu_custom_call.1} parent=39 // pred_fallthru
          _
      $region40: #{tpu_custom_call.1} parent=5 // pred_fallthru
        _
      %p1223 = scmp.le.s32.totalorder 2, %s21
      // Predicated region
      $region45: #{tpu_custom_call.1} parent=5 // pred_check
        %p1224 = pneg %p1223
      $region46: #{tpu_custom_call.1} parent=5 // pred_check_branch
        %1226 = sbr.rel (%p1224) target = $region48
      $region47: #{tpu_custom_call.1} parent=5 // pred_region
        %s1227 = ssub.s32 %s21, 2
        // Predicated region
        $region49: #{tpu_custom_call.1} parent=47 // pred_check
          %p1228 = pneg %p188
        $region50: #{tpu_custom_call.1} parent=47 // pred_check_branch
          %1230 = sbr.rel (%p1228) target = $region52
        $region51: #{tpu_custom_call.1} parent=47 // pred_region
          %s1231 = sand.u32 %s173, 1
          %s1232 = scalar_lea.sflag [#allocation5], %s1231
          %s1233 = sand.u32 %s173, 1
          %s1234 = smul.addr %s1233, 256
          %s1235 = scalar_lea.vmem [#allocation4], %s1234
          %1236 = dma.done %s1232, 4096
        $region52: #{tpu_custom_call.1} parent=47 // pred_fallthru
          _
      $region48: #{tpu_custom_call.1} parent=5 // pred_fallthru
        _
    $region6: #{tpu_custom_call.1} parent=1 // loop_footer
      %s25 = sadd.s32 1, %s21
    $region7: #{tpu_custom_call.1} parent=1 // loop_footer_branch
      %20 = sbr.rel target = $region3
    $region8: #{tpu_custom_call.1} parent=1 // loop_exit
      _
    %1237 = vsyncpa [#allocation5], 1
    %s1238 = scalar_lea.sflag [#allocation5], 1
    %1239 = vsyncpa %s1238, 1

</llo_original>
